<compile_context>
chip_gen: v5e
topology: v5e:2x2
jax: 0.10.0
libtpu: 0.0.40
codegen_flags: <defaults>
</compile_context>

<pallas_src>
import functools

import jax
import jax.numpy as jnp
from jax.experimental import pallas as pl
from jax.experimental.pallas import tpu as pltpu


def _round_up(x, m):
    return (x + m - 1) // m * m


def _cross_attn_kernel(eps, n_heads,
                       x_ref, kv_ref, lnw_ref, wq_ref, wkv_ref, wo_ref,
                       o_ref,
                       kv_scratch):
    # x_ref:    (1, tq, D)       query-side hidden-state tile
    # kv_ref:   (1, Skv, D)      full key/value states for this batch element
    # lnw_ref:  (1, D)           RMSNorm scale
    # wq_ref:   (D, inner)       Wq (nn.Linear weight transposed)
    # wkv_ref:  (D, 2*inner)     [Wk | Wv] fused
    # wo_ref:   (inner, D)       Wo
    # kv_scratch: (Skv, 2*inner) projected K|V in model dtype, persists across q tiles
    tq = x_ref.shape[1]
    Skv = kv_ref.shape[1]
    inner = wq_ref.shape[1]
    dk = inner // n_heads
    cdtype = x_ref.dtype  # model/compute dtype for MXU operands

    # --- project K and V once per batch element (query-tile axis is innermost, sequential) ---
    @pl.when(pl.program_id(1) == 0)
    def _():
        kvp = jnp.dot(kv_ref[0], wkv_ref[...],
                      preferred_element_type=jnp.float32)          # (Skv, 2*inner) fp32 acc
        kv_scratch[...] = kvp.astype(kv_scratch.dtype)

    x = x_ref[0]                                                    # (tq, D) model dtype
    xf = x.astype(jnp.float32)

    # --- T5 LayerNorm (RMSNorm, fp32 variance), result back in model dtype ---
    var = jnp.mean(xf * xf, axis=-1, keepdims=True)
    normed = (lnw_ref[...].astype(jnp.float32)
              * (xf * jax.lax.rsqrt(var + eps))).astype(cdtype)     # (tq, D)

    # --- Q projection (model-dtype operands, fp32 accumulation) ---
    q = jnp.dot(normed, wq_ref[...],
                preferred_element_type=jnp.float32).astype(cdtype)  # (tq, inner)

    kv_all = kv_scratch[...]
    k = kv_all[:, :inner]                                           # (Skv, inner)
    v = kv_all[:, inner:]                                           # (Skv, inner)

    # --- head-batched attention (H is the dot_general batch dim) ---
    qh = jnp.swapaxes(q.reshape(tq, n_heads, dk), 0, 1)             # (H, tq, dk)
    kh = jnp.swapaxes(k.reshape(Skv, n_heads, dk), 0, 1)            # (H, Skv, dk)
    vh = jnp.swapaxes(v.reshape(Skv, n_heads, dk), 0, 1)            # (H, Skv, dk)

    s = jnp.einsum('hqd,hkd->hqk', qh, kh,
                   preferred_element_type=jnp.float32)              # (H, tq, Skv) fp32
    s = s - jnp.max(s, axis=-1, keepdims=True)                      # no 1/sqrt(dk) in T5
    p = jnp.exp(s)
    denom = jnp.sum(p, axis=-1, keepdims=True)                      # (H, tq, 1) fp32

    ctx = jnp.einsum('hqk,hkd->hqd', p.astype(cdtype), vh,
                     preferred_element_type=jnp.float32)            # (H, tq, dk) fp32
    ctx = ctx * pl.reciprocal(denom, approx=True)                   # normalize after PV

    # --- output projection + residual (dropout = identity in eval mode) ---
    ctx2d = jnp.swapaxes(ctx, 0, 1).reshape(tq, inner).astype(cdtype)   # (tq, inner)
    attn = jnp.dot(ctx2d, wo_ref[...],
                   preferred_element_type=jnp.float32)              # (tq, D) fp32
    o_ref[0] = (xf + attn).astype(o_ref.dtype)


def llmpu_layer_cross_attention(hidden_states, key_value_states, ln_weight,
                                wq, wk, wv, wo, *, n_heads, eps=1e-6, tq=128):
    """hidden_states: (B, Sq, d_model); key_value_states: (B, Skv, d_model).
    ln_weight: (d_model,). wq/wk/wv: (d_model, inner_dim), wo: (inner_dim, d_model)
    (i.e. PyTorch nn.Linear weights transposed)."""
    B, Sq, D = hidden_states.shape
    Bk, Skv, Dk = key_value_states.shape
    assert Bk == B and Dk == D
    inner_dim = wq.shape[1]
    assert inner_dim % n_heads == 0

    # Query tile: dtype-aware sublane multiple (fp32:8, bf16/fp16:16, int8/fp8:32).
    itemsize = jnp.dtype(hidden_states.dtype).itemsize
    sub = {4: 8, 2: 16, 1: 32}.get(itemsize, 8)
    tq = max(sub, min(tq, _round_up(Sq, sub)))
    tq = _round_up(tq, sub)
    Sq_pad = _round_up(Sq, tq)
    hidden_p = hidden_states
    if Sq_pad != Sq:
        hidden_p = jnp.pad(hidden_states, ((0, 0), (0, Sq_pad - Sq), (0, 0)))
    n_q = Sq_pad // tq

    lnw2d = ln_weight.reshape(1, D)
    wkv = jnp.concatenate([wk, wv], axis=1)                         # (D, 2*inner)

    in_b = itemsize
    kv_b = jnp.dtype(key_value_states.dtype).itemsize
    w_b = jnp.dtype(wq.dtype).itemsize

    # VMEM budget from actual buffer sizes (double-buffered pipelined blocks + scratch
    # + fp32 intermediates), clamped to 64 MiB so it is valid on v7x as well.
    vmem = 0
    vmem += 2 * 2 * tq * D * in_b                                   # x tile + out tile
    vmem += 2 * Skv * D * kv_b                                      # kv block
    vmem += 2 * D * w_b                                             # layernorm weight
    vmem += 2 * (D * inner_dim + D * 2 * inner_dim + inner_dim * D) * w_b   # wq, wkv, wo
    vmem += Skv * 2 * inner_dim * in_b                              # K|V scratch
    vmem += 2 * n_heads * tq * Skv * 4                              # scores + probs (fp32)
    vmem += 2 * tq * inner_dim * 4 + 2 * tq * D * 4                 # q/ctx/normed intermediates
    vmem_limit = int(min(max(vmem * 1.5 + (4 << 20), 16 << 20), 64 << 20))

    # Advisory cost estimate for the XLA scheduler (real itemsizes).
    flops = int(2 * B * Skv * D * 2 * inner_dim                     # fused K,V projection
                + 2 * B * Sq_pad * D * inner_dim                    # Q projection
                + 4 * B * Sq_pad * Skv * inner_dim                  # scores + attn @ V
                + 2 * B * Sq_pad * inner_dim * D)                   # output projection
    transcendentals = int(B * n_heads * Sq_pad * Skv)               # exp in softmax
    bytes_accessed = int(in_b * (hidden_p.size + B * Sq_pad * D)
                         + kv_b * key_value_states.size
                         + w_b * (wq.size + wkv.size + wo.size + lnw2d.size))

    out = pl.pallas_call(
        functools.partial(_cross_attn_kernel, float(eps), int(n_heads)),
        out_shape=jax.ShapeDtypeStruct((B, Sq_pad, D), hidden_states.dtype),
        grid_spec=pltpu.PrefetchScalarGridSpec(
            num_scalar_prefetch=0,
            grid=(B, n_q),
            in_specs=[
                pl.BlockSpec((1, tq, D), lambda b, i: (b, i, 0)),       # query hidden tile
                pl.BlockSpec((1, Skv, D), lambda b, i: (b, 0, 0)),      # key/value states
                pl.BlockSpec((1, D), lambda b, i: (0, 0)),              # layernorm weight
                pl.BlockSpec((D, inner_dim), lambda b, i: (0, 0)),      # wq
                pl.BlockSpec((D, 2 * inner_dim), lambda b, i: (0, 0)),  # wk|wv fused
                pl.BlockSpec((inner_dim, D), lambda b, i: (0, 0)),      # wo
            ],
            out_specs=pl.BlockSpec((1, tq, D), lambda b, i: (b, i, 0)),
            scratch_shapes=[
                # projected K|V in model dtype, reused across query tiles of a batch elem
                pltpu.VMEM((Skv, 2 * inner_dim), hidden_states.dtype),
            ],
        ),
        compiler_params=pltpu.CompilerParams(
            dimension_semantics=("parallel", "arbitrary"),
            vmem_limit_bytes=vmem_limit,
        ),
        cost_estimate=pl.CostEstimate(
            flops=flops, transcendentals=transcendentals, bytes_accessed=bytes_accessed),
    )(hidden_p, key_value_states, lnw2d, wq, wkv, wo)

    if Sq_pad != Sq:
        out = out[:, :Sq, :]
    return out
    # TODO(synk): attention_mask / position_bias / layer_head_mask / past_key_value
    # (use_cache) / output_attentions paths of LLmPULayerCrossAttention are not
    # implemented; this is the default eval-mode path (all None, dropout identity).
    # TODO(synk): for very long Skv on v7x (64 MiB VMEM), stream Skv tiles with online
    # softmax instead of keeping the whole projected K|V resident.


def _reference(hidden_states, key_value_states, ln_weight, wq, wk, wv, wo,
               *, n_heads, eps=1e-6):
    x = hidden_states.astype(jnp.float32)
    var = jnp.mean(x * x, axis=-1, keepdims=True)
    normed = ln_weight * (x * jax.lax.rsqrt(var + eps))
    B, Sq, D = hidden_states.shape
    Skv = key_value_states.shape[1]
    inner_dim = wq.shape[1]
    d_kv = inner_dim // n_heads
    kv = key_value_states.astype(jnp.float32)
    q = (normed @ wq).reshape(B, Sq, n_heads, d_kv).transpose(0, 2, 1, 3)
    k = (kv @ wk).reshape(B, Skv, n_heads, d_kv).transpose(0, 2, 1, 3)
    v = (kv @ wv).reshape(B, Skv, n_heads, d_kv).transpose(0, 2, 1, 3)
    scores = jnp.einsum('bhqd,bhkd->bhqk', q, k)            # no 1/sqrt(d_kv) in T5
    w = jax.nn.softmax(scores, axis=-1)
    ctx = jnp.einsum('bhqk,bhkd->bhqd', w, v)
    ctx = ctx.transpose(0, 2, 1, 3).reshape(B, Sq, inner_dim)
    return hidden_states + ctx @ wo


if __name__ == "__main__":
    # Small config consistent with the module (lane-dense last dim):
    # d_model=128, n_heads=4, d_kv=32 (inner_dim=128), batch=2, seq_q=8, seq_kv=16.
    B, Sq, Skv, D, H, DK = 2, 8, 16, 128, 4, 32
    INNER = H * DK
    key = jax.random.PRNGKey(0)
    kx, kkv, kq, kk, kv_, ko, kln = jax.random.split(key, 7)

    hidden = jax.random.normal(kx, (B, Sq, D), dtype=jnp.float32)
    kv_states = jax.random.normal(kkv, (B, Skv, D), dtype=jnp.float32)
    # nn.Linear weights stored transposed as (in, out); LLmPULayerNorm weight ~ ones.
    wq = jax.random.normal(kq, (D, INNER), dtype=jnp.float32) * 0.05
    wk = jax.random.normal(kk, (D, INNER), dtype=jnp.float32) * 0.05
    wv = jax.random.normal(kv_, (D, INNER), dtype=jnp.float32) * 0.05
    wo = jax.random.normal(ko, (INNER, D), dtype=jnp.float32) * 0.05
    ln_weight = jnp.ones((D,), dtype=jnp.float32) + 0.01 * jax.random.normal(
        kln, (D,), dtype=jnp.float32)

    out = llmpu_layer_cross_attention(hidden, kv_states, ln_weight, wq, wk, wv, wo,
                                      n_heads=H, eps=1e-6)
    out = jax.block_until_ready(out)

    ref = _reference(hidden, kv_states, ln_weight, wq, wk, wv, wo, n_heads=H, eps=1e-6)
    assert out.shape == (B, Sq, D)
    # approx reciprocal in the softmax normalization -> slightly looser tolerance
    assert jnp.allclose(out, ref, atol=2e-3, rtol=2e-3), "mismatch vs reference"

    print("KERNEL_OK")
</pallas_src>

<mosaic_0001>
module attributes {stable_mosaic.version = 11 : i64} {
  func.func @_cross_attn_kernel(%arg0: i32, %arg1: i32, %arg2: memref<1x8x128xf32, #tpu.memory_space<vmem>>, %arg3: memref<1x16x128xf32, #tpu.memory_space<vmem>>, %arg4: memref<1x128xf32, #tpu.memory_space<vmem>>, %arg5: memref<128x128xf32, #tpu.memory_space<vmem>>, %arg6: memref<128x256xf32, #tpu.memory_space<vmem>>, %arg7: memref<128x128xf32, #tpu.memory_space<vmem>>, %arg8: memref<1x8x128xf32, #tpu.memory_space<vmem>>, %arg9: memref<16x256xf32, #tpu.memory_space<vmem>>) attributes {dimension_semantics = [#tpu.dimension_semantics<parallel>, #tpu.dimension_semantics<arbitrary>], iteration_bounds = array<i64: 2, 1>, scalar_prefetch = 0 : i64, scratch_operands = 1 : i64, tpu.core_type = #tpu.core_type<tc>, window_params = [{transform_indices = @transform_0, window_bounds = array<i64: 1, 8, 128>}, {transform_indices = @transform_1, window_bounds = array<i64: 1, 16, 128>}, {pipeline_mode = #tpu.pipeline_mode<synchronous>, transform_indices = @transform_2, window_bounds = array<i64: 1, 128>}, {pipeline_mode = #tpu.pipeline_mode<synchronous>, transform_indices = @transform_3, window_bounds = array<i64: 128, 128>}, {pipeline_mode = #tpu.pipeline_mode<synchronous>, transform_indices = @transform_4, window_bounds = array<i64: 128, 256>}, {pipeline_mode = #tpu.pipeline_mode<synchronous>, transform_indices = @transform_5, window_bounds = array<i64: 128, 128>}, {transform_indices = @transform_6, window_bounds = array<i64: 1, 8, 128>}]} {
    %c0_i32 = arith.constant 0 : i32
    %0 = arith.cmpi eq, %arg1, %c0_i32 : i32
    %1 = arith.extui %0 : i1 to i32
    %c0_i32_0 = arith.constant 0 : i32
    %2 = arith.cmpi ne, %1, %c0_i32_0 : i32
    scf.if %2 {
      %c0_22 = arith.constant 0 : index
      %c0_23 = arith.constant 0 : index
      %c0_24 = arith.constant 0 : index
      %49 = vector.load %arg3[%c0_22, %c0_23, %c0_24] : memref<1x16x128xf32, #tpu.memory_space<vmem>>, vector<1x16x128xf32>
      %50 = vector.shape_cast %49 : vector<1x16x128xf32> to vector<16x128xf32>
      %c0_25 = arith.constant 0 : index
      %c0_26 = arith.constant 0 : index
      %51 = vector.load %arg6[%c0_25, %c0_26] : memref<128x256xf32, #tpu.memory_space<vmem>>, vector<128x256xf32>
      %cst_27 = arith.constant dense<0.000000e+00> : vector<16x256xf32>
      %52 = tpu.matmul %50, %51, %cst_27 {dimension_numbers = #tpu.dot_dimension_numbers<[1], [0], [0], [1], [0, 0, 1, 1], [], []>} : vector<16x128xf32>, vector<128x256xf32>, vector<16x256xf32> -> vector<16x256xf32>
      %c0_28 = arith.constant 0 : index
      %c0_29 = arith.constant 0 : index
      %53 = vector.load %arg9[%c0_28, %c0_29] : memref<16x256xf32, #tpu.memory_space<vmem>>, vector<16x256xf32>
      tpu.vector_store %arg9[%c0_28, %c0_29], %52 {strides = array<i32>} : memref<16x256xf32, #tpu.memory_space<vmem>>, vector<16x256xf32>,
    } else {
    }
    %c0 = arith.constant 0 : index
    %c0_1 = arith.constant 0 : index
    %c0_2 = arith.constant 0 : index
    %3 = vector.load %arg2[%c0, %c0_1, %c0_2] : memref<1x8x128xf32, #tpu.memory_space<vmem>>, vector<1x8x128xf32>
    %4 = vector.shape_cast %3 : vector<1x8x128xf32> to vector<8x128xf32>
    %5 = arith.mulf %4, %4 : vector<8x128xf32>
    %cst = arith.constant dense<0.000000e+00> : vector<8xf32>
    %6 = vector.multi_reduction <add>, %5, %cst [1] : vector<8x128xf32> to vector<8xf32>
    %7 = vector.shape_cast %6 : vector<8xf32> to vector<8x1xf32>
    %cst_3 = arith.constant 1.280000e+02 : f32
    %8 = vector.broadcast %cst_3 : f32 to vector<8x1xf32>
    %9 = arith.divf %7, %8 : vector<8x1xf32>
    %c0_4 = arith.constant 0 : index
    %c0_5 = arith.constant 0 : index
    %10 = vector.load %arg4[%c0_4, %c0_5] : memref<1x128xf32, #tpu.memory_space<vmem>>, vector<1x128xf32>
    %cst_6 = arith.constant 9.99999997E-7 : f32
    %11 = vector.broadcast %cst_6 : f32 to vector<8x1xf32>
    %12 = arith.addf %9, %11 : vector<8x1xf32>
    %13 = math.rsqrt %12 : vector<8x1xf32>
    %14 = vector.broadcast %13 : vector<8x1xf32> to vector<8x128xf32>
    %15 = arith.mulf %4, %14 : vector<8x128xf32>
    %16 = vector.broadcast %10 : vector<1x128xf32> to vector<8x128xf32>
    %17 = arith.mulf %16, %15 : vector<8x128xf32>
    %c0_7 = arith.constant 0 : index
    %c0_8 = arith.constant 0 : index
    %18 = vector.load %arg5[%c0_7, %c0_8] : memref<128x128xf32, #tpu.memory_space<vmem>>, vector<128x128xf32>
    %cst_9 = arith.constant dense<0.000000e+00> : vector<8x128xf32>
    %19 = tpu.matmul %17, %18, %cst_9 {dimension_numbers = #tpu.dot_dimension_numbers<[1], [0], [0], [1], [0, 0, 1, 1], [], []>} : vector<8x128xf32>, vector<128x128xf32>, vector<8x128xf32> -> vector<8x128xf32>
    %c0_10 = arith.constant 0 : index
    %c0_11 = arith.constant 0 : index
    %20 = vector.load %arg9[%c0_10, %c0_11] : memref<16x256xf32, #tpu.memory_space<vmem>>, vector<16x256xf32>
    %21 = vector.extract_strided_slice %20 {offsets = [0, 0], sizes = [16, 128], strides = [1, 1]} : vector<16x256xf32> to vector<16x128xf32>
    %22 = vector.extract_strided_slice %20 {offsets = [0, 128], sizes = [16, 128], strides = [1, 1]} : vector<16x256xf32> to vector<16x128xf32>
    %23 = vector.shape_cast %19 : vector<8x128xf32> to vector<8x4x32xf32>
    %24 = tpu.transpose %23, [1, 0, 2] : vector<8x4x32xf32> -> vector<4x8x32xf32>
    %25 = vector.shape_cast %21 : vector<16x128xf32> to vector<16x4x32xf32>
    %26 = tpu.transpose %25, [1, 0, 2] : vector<16x4x32xf32> -> vector<4x16x32xf32>
    %27 = vector.shape_cast %22 : vector<16x128xf32> to vector<16x4x32xf32>
    %28 = tpu.transpose %27, [1, 0, 2] : vector<16x4x32xf32> -> vector<4x16x32xf32>
    "tpu.trace_start"() <{level = 10 : i32, message = "hqd,hkd->hqk"}> : () -> ()
    %cst_12 = arith.constant dense<0.000000e+00> : vector<4x8x16xf32>
    %29 = tpu.matmul %24, %26, %cst_12 {dimension_numbers = #tpu.dot_dimension_numbers<[2], [2], [1], [1], [0, 0, 0, 1, 1, 1], [0], [0]>} : vector<4x8x32xf32>, vector<4x16x32xf32>, vector<4x8x16xf32> -> vector<4x8x16xf32>
    "tpu.trace_stop"() : () -> ()
    %cst_13 = arith.constant dense<0xFF800000> : vector<4x8xf32>
    %30 = vector.multi_reduction <maximumf>, %29, %cst_13 [2] : vector<4x8x16xf32> to vector<4x8xf32>
    %31 = vector.shape_cast %30 : vector<4x8xf32> to vector<4x8x1xf32>
    %32 = vector.broadcast %31 : vector<4x8x1xf32> to vector<4x8x16xf32>
    %33 = arith.subf %29, %32 : vector<4x8x16xf32>
    %34 = math.exp %33 : vector<4x8x16xf32>
    %cst_14 = arith.constant dense<0.000000e+00> : vector<4x8xf32>
    %35 = vector.multi_reduction <add>, %34, %cst_14 [2] : vector<4x8x16xf32> to vector<4x8xf32>
    %36 = vector.shape_cast %35 : vector<4x8xf32> to vector<4x8x1xf32>
    "tpu.trace_start"() <{level = 10 : i32, message = "hqk,hkd->hqd"}> : () -> ()
    %cst_15 = arith.constant dense<0.000000e+00> : vector<4x8x32xf32>
    %37 = tpu.matmul %34, %28, %cst_15 {dimension_numbers = #tpu.dot_dimension_numbers<[2], [1], [1], [2], [0, 0, 0, 1, 1, 2], [0], [0]>} : vector<4x8x16xf32>, vector<4x16x32xf32>, vector<4x8x32xf32> -> vector<4x8x32xf32>
    "tpu.trace_stop"() : () -> ()
    %38 = tpu.reciprocal %36 {approx = true} : vector<4x8x1xf32> -> vector<4x8x1xf32>
    %39 = vector.broadcast %38 : vector<4x8x1xf32> to vector<4x8x32xf32>
    %40 = arith.mulf %37, %39 : vector<4x8x32xf32>
    %41 = tpu.transpose %40, [1, 0, 2] : vector<4x8x32xf32> -> vector<8x4x32xf32>
    %42 = vector.shape_cast %41 : vector<8x4x32xf32> to vector<8x128xf32>
    %c0_16 = arith.constant 0 : index
    %c0_17 = arith.constant 0 : index
    %43 = vector.load %arg7[%c0_16, %c0_17] : memref<128x128xf32, #tpu.memory_space<vmem>>, vector<128x128xf32>
    %cst_18 = arith.constant dense<0.000000e+00> : vector<8x128xf32>
    %44 = tpu.matmul %42, %43, %cst_18 {dimension_numbers = #tpu.dot_dimension_numbers<[1], [0], [0], [1], [0, 0, 1, 1], [], []>} : vector<8x128xf32>, vector<128x128xf32>, vector<8x128xf32> -> vector<8x128xf32>
    %45 = arith.addf %4, %44 : vector<8x128xf32>
    %c0_19 = arith.constant 0 : index
    %c0_20 = arith.constant 0 : index
    %c0_21 = arith.constant 0 : index
    %46 = vector.load %arg8[%c0_19, %c0_20, %c0_21] : memref<1x8x128xf32, #tpu.memory_space<vmem>>, vector<1x8x128xf32>
    %47 = vector.shape_cast %46 : vector<1x8x128xf32> to vector<8x128xf32>
    %48 = vector.shape_cast %45 : vector<8x128xf32> to vector<1x8x128xf32>
    tpu.vector_store %arg8[%c0_19, %c0_20, %c0_21], %48 {strides = array<i32>} : memref<1x8x128xf32, #tpu.memory_space<vmem>>, vector<1x8x128xf32>,
    return
  }
  func.func @transform_0(%arg0: i32, %arg1: i32) -> (i32, i32, i32) {
    %c0_i32 = arith.constant 0 : i32
    %c0_i32_0 = arith.constant 0 : i32
    return %arg0, %arg1, %c0_i32 : i32, i32, i32
  }
  func.func @transform_1(%arg0: i32, %arg1: i32) -> (i32, i32, i32) {
    %c0_i32 = arith.constant 0 : i32
    %c0_i32_0 = arith.constant 0 : i32
    %c0_i32_1 = arith.constant 0 : i32
    return %arg0, %c0_i32, %c0_i32_0 : i32, i32, i32
  }
  func.func @transform_2(%arg0: i32, %arg1: i32) -> (i32, i32) {
    %c0_i32 = arith.constant 0 : i32
    %c0_i32_0 = arith.constant 0 : i32
    %c0_i32_1 = arith.constant 0 : i32
    return %c0_i32, %c0_i32_0 : i32, i32
  }
  func.func @transform_3(%arg0: i32, %arg1: i32) -> (i32, i32) {
    %c0_i32 = arith.constant 0 : i32
    %c0_i32_0 = arith.constant 0 : i32
    %c0_i32_1 = arith.constant 0 : i32
    return %c0_i32, %c0_i32_0 : i32, i32
  }
  func.func @transform_4(%arg0: i32, %arg1: i32) -> (i32, i32) {
    %c0_i32 = arith.constant 0 : i32
    %c0_i32_0 = arith.constant 0 : i32
    %c0_i32_1 = arith.constant 0 : i32
    return %c0_i32, %c0_i32_0 : i32, i32
  }
  func.func @transform_5(%arg0: i32, %arg1: i32) -> (i32, i32) {
    %c0_i32 = arith.constant 0 : i32
    %c0_i32_0 = arith.constant 0 : i32
    %c0_i32_1 = arith.constant 0 : i32
    return %c0_i32, %c0_i32_0 : i32, i32
  }
  func.func @transform_6(%arg0: i32, %arg1: i32) -> (i32, i32, i32) {
    %c0_i32 = arith.constant 0 : i32
    %c0_i32_0 = arith.constant 0 : i32
    return %arg0, %arg1, %c0_i32 : i32, i32, i32
  }
}

</mosaic_0001>

<llo_original>
// kernel: tpu_custom_call.1
$region0: #{tpu_custom_call.1}
  #allocation0 [shape = 'u32[]', space=smem, size = 0x4, offset = 0x4, fixed_abs, tag = 'smem constant byte address 0x4 - core index']
  #allocation1 [shape = 'u32[72,128]{1,0:T(1,128)}', space=vmem, size = 0x9000, scoped, tag = 'internal scratch']
  #allocation2 [shape = 'f32[16,256]{1,0:T(8,128)}', space=vmem, size = 0x4000, scoped, tag = 'scratch operand']
  %s0 = inlined_call_operand.hbm [shape: f32[2,8,128], index: 0, kind: input, shape index: {}]
  %s1 = inlined_call_operand.hbm [shape: f32[2,16,128], index: 1, kind: input, shape index: {}]
  %s2 = inlined_call_operand.vmem [shape: f32[1,128], index: 2, kind: input, shape index: {}]
  %s3 = inlined_call_operand.hbm [shape: f32[128,128], index: 3, kind: input, shape index: {}]
  %s4 = inlined_call_operand.hbm [shape: f32[128,256], index: 4, kind: input, shape index: {}]
  %s5 = inlined_call_operand.hbm [shape: f32[128,128], index: 5, kind: input, shape index: {}]
  %s6 = inlined_call_operand.hbm [shape: f32[2,8,128], index: 6, kind: output, shape index: {}]
  %s7 = sld [smem:[#allocation0]]
  $region81: #{tpu_custom_call.1} parent=0
    _
  %s9 = ssub.s32 1, %s7
  %s10 = scalar_select 0, %s9, %s7
  $region1: #{tpu_custom_call.1} parent=0
    #allocation3 [shape = 'u8[8192]{0}', space=vmem, size = 0x2000, scoped, tag = 'input window, operand 0']
    #allocation4 [shape = 's32[2]{0}', space=sflag, size = 0x8, scoped, tag = 'scoped memory for tpu_custom_call.1']
    #allocation5 [shape = 's32[2]{0}', space=sflag, size = 0x8, scoped, tag = 'scoped memory for tpu_custom_call.1']
    #allocation6 [shape = 'u8[16384]{0}', space=vmem, size = 0x4000, scoped, tag = 'input window, operand 1']
    #allocation7 [shape = 's32[2]{0}', space=sflag, size = 0x8, scoped, tag = 'scoped memory for tpu_custom_call.1']
    #allocation8 [shape = 'u8[65536]{0}', space=vmem, size = 0x10000, scoped, tag = 'input window, operand 3, single buffered']
    #allocation9 [shape = 'u8[131072]{0}', space=vmem, size = 0x20000, scoped, tag = 'input window, operand 4, single buffered']
    #allocation10 [shape = 's32[1]{0}', space=sflag, size = 0x4, scoped, tag = 'scoped memory for tpu_custom_call.1']
    #allocation11 [shape = 'u8[65536]{0}', space=vmem, size = 0x10000, scoped, tag = 'input window, operand 5, single buffered']
    #allocation12 [shape = 'u8[8192]{0}', space=vmem, size = 0x2000, scoped, tag = 'output window, operand 0']
    %11 = vsyncpa [#allocation4], 0
    %s12 = scalar_lea.sflag [#allocation4], 1
    %13 = vsyncpa %s12, 0
    %14 = vsyncpa [#allocation7], 0
    %s15 = scalar_lea.sflag [#allocation7], 1
    %16 = vsyncpa %s15, 0
    %17 = vsyncpa [#allocation10], 0
    %18 = vsyncpa [#allocation5], 0
    %s19 = scalar_lea.sflag [#allocation5], 1
    %20 = vsyncpa %s19, 0
    loop: start=0, step=1, limit=4
    $region2: #{tpu_custom_call.1} parent=1 // loop_pre_header
      _
    $region3: #{tpu_custom_call.1} parent=1 // loop_header
      %s22 = sphi 0, %s26
      %p23 = scmp.ge.s32.totalorder %s22, 4
      %s29 = sphi 0, %s41
      %s30 = sphi 0, %s37
      %s31 = sphi 0, %s29
      %s32 = sphi 0, %s30
      %s33 = sphi 0, %s31
      %s34 = sphi 0, %s32
      %s46 = sphi 0, %s48
      %s49 = sphi 0, %s46
      %s50 = sphi 0, %s49
      %s66 = sphi 0, %s50
      %s72 = sphi 0, %s74
      %s75 = sphi 0, %s72
      %s76 = sphi 0, %s75
      %s92 = sphi 0, %s76
      %s96 = sphi 0, %s96
      %s98 = sphi 0, %s96
      %s99 = sphi 0, %s98
      %s113 = sphi 0, %s99
      %s117 = sphi 0, %s117
      %s119 = sphi 0, %s117
      %s120 = sphi 0, %s119
      %s134 = sphi 0, %s120
      %s138 = sphi 0, %s138
      %s140 = sphi 0, %s138
      %s141 = sphi 0, %s140
      %s155 = sphi 0, %s141
      %s159 = sphi 0, %s159
      %s161 = sphi 0, %s159
      %s162 = sphi 0, %s161
      %s176 = sphi 0, %s162
      %s184 = sphi 0, %s186
      %s187 = sphi 0, %s184
      %s188 = sphi 0, %s187
      %s204 = sphi 0, %s188
    $region4: #{tpu_custom_call.1} parent=1 // loop_header_branch
      %25 = sbr.rel (%p23) target = $region8
    $region5: #{tpu_custom_call.1} parent=1 // loop_body
      %s27 = ssub.s32 %s22, 1
      %s28 = ssub.s32 %s22, 2
      %s35 = sadd.s32 1, %s30
      %p36 = scmp.ge.s32.totalorder %s35, 1
      %s37 = scalar_select %p36, 0, %s35
      %s38 = sadd.s32 1, %s29
      %s39 = scalar_select %p36, %s38, %s29
      %p40 = scmp.ge.s32.totalorder %s39, 2
      %s41 = scalar_select %p40, 0, %s39
      %s42 = ssub.s32 %s29, %s41
      %s43 = ssub.s32 %s30, %s37
      %s44 = sor.u32 %s42, %s43
      %p45 = scmp.eq.s32.totalorder %s44, 0
      %s47 = sadd.s32 %s46, 1
      %s48 = scalar_select %p45, %s46, %s47
      %p51 = pneg %p45
      %p52 = scmp.eq.s32.totalorder %s22, 1
      %p53 = por %p51, %p52
      %p54 = scmp.ne.s32.totalorder %s46, %s49
      %p55 = scmp.eq.s32.totalorder %s22, 0
      %p56 = por %p54, %p55
      %p57 = scmp.ne.s32.totalorder %s46, %s49
      %p58 = scmp.eq.s32.totalorder %s27, 1
      %p59 = por %p57, %p58
      %p60 = scmp.ne.s32.totalorder %s49, %s50
      %p61 = scmp.eq.s32.totalorder %s27, 0
      %p62 = por %p60, %p61
      %p63 = scmp.ne.s32.totalorder %s49, %s50
      %p64 = scmp.eq.s32.totalorder %s28, 1
      %p65 = por %p63, %p64
      %p67 = scmp.ne.s32.totalorder %s50, %s66
      %p68 = scmp.eq.s32.totalorder %s28, 0
      %p69 = por %p67, %p68
      %s70 = ssub.s32 %s29, %s41
      %p71 = scmp.eq.s32.totalorder %s70, 0
      %s73 = sadd.s32 %s72, 1
      %s74 = scalar_select %p71, %s72, %s73
      %p77 = pneg %p71
      %p78 = scmp.eq.s32.totalorder %s22, 1
      %p79 = por %p77, %p78
      %p80 = scmp.ne.s32.totalorder %s72, %s75
      %p81 = scmp.eq.s32.totalorder %s22, 0
      %p82 = por %p80, %p81
      %p83 = scmp.ne.s32.totalorder %s72, %s75
      %p84 = scmp.eq.s32.totalorder %s27, 1
      %p85 = por %p83, %p84
      %p86 = scmp.ne.s32.totalorder %s75, %s76
      %p87 = scmp.eq.s32.totalorder %s27, 0
      %p88 = por %p86, %p87
      %p89 = scmp.ne.s32.totalorder %s75, %s76
      %p90 = scmp.eq.s32.totalorder %s28, 1
      %p91 = por %p89, %p90
      %p93 = scmp.ne.s32.totalorder %s76, %s92
      %p94 = scmp.eq.s32.totalorder %s28, 0
      %p95 = por %p93, %p94
      %s97 = sadd.s32 %s96, 1
      %p100 = scmp.eq.s32.totalorder %s22, 1
      %p101 = scmp.ne.s32.totalorder %s96, %s98
      %p102 = scmp.eq.s32.totalorder %s22, 0
      %p103 = por %p101, %p102
      %p104 = scmp.ne.s32.totalorder %s96, %s98
      %p105 = scmp.eq.s32.totalorder %s27, 1
      %p106 = por %p104, %p105
      %p107 = scmp.ne.s32.totalorder %s98, %s99
      %p108 = scmp.eq.s32.totalorder %s27, 0
      %p109 = por %p107, %p108
      %p110 = scmp.ne.s32.totalorder %s98, %s99
      %p111 = scmp.eq.s32.totalorder %s28, 1
      %p112 = por %p110, %p111
      %p114 = scmp.ne.s32.totalorder %s99, %s113
      %p115 = scmp.eq.s32.totalorder %s28, 0
      %p116 = por %p114, %p115
      %s118 = sadd.s32 %s117, 1
      %p121 = scmp.eq.s32.totalorder %s22, 1
      %p122 = scmp.ne.s32.totalorder %s117, %s119
      %p123 = scmp.eq.s32.totalorder %s22, 0
      %p124 = por %p122, %p123
      %p125 = scmp.ne.s32.totalorder %s117, %s119
      %p126 = scmp.eq.s32.totalorder %s27, 1
      %p127 = por %p125, %p126
      %p128 = scmp.ne.s32.totalorder %s119, %s120
      %p129 = scmp.eq.s32.totalorder %s27, 0
      %p130 = por %p128, %p129
      %p131 = scmp.ne.s32.totalorder %s119, %s120
      %p132 = scmp.eq.s32.totalorder %s28, 1
      %p133 = por %p131, %p132
      %p135 = scmp.ne.s32.totalorder %s120, %s134
      %p136 = scmp.eq.s32.totalorder %s28, 0
      %p137 = por %p135, %p136
      %s139 = sadd.s32 %s138, 1
      %p142 = scmp.eq.s32.totalorder %s22, 1
      %p143 = scmp.ne.s32.totalorder %s138, %s140
      %p144 = scmp.eq.s32.totalorder %s22, 0
      %p145 = por %p143, %p144
      %p146 = scmp.ne.s32.totalorder %s138, %s140
      %p147 = scmp.eq.s32.totalorder %s27, 1
      %p148 = por %p146, %p147
      %p149 = scmp.ne.s32.totalorder %s140, %s141
      %p150 = scmp.eq.s32.totalorder %s27, 0
      %p151 = por %p149, %p150
      %p152 = scmp.ne.s32.totalorder %s140, %s141
      %p153 = scmp.eq.s32.totalorder %s28, 1
      %p154 = por %p152, %p153
      %p156 = scmp.ne.s32.totalorder %s141, %s155
      %p157 = scmp.eq.s32.totalorder %s28, 0
      %p158 = por %p156, %p157
      %s160 = sadd.s32 %s159, 1
      %p163 = scmp.eq.s32.totalorder %s22, 1
      %p164 = scmp.ne.s32.totalorder %s159, %s161
      %p165 = scmp.eq.s32.totalorder %s22, 0
      %p166 = por %p164, %p165
      %p167 = scmp.ne.s32.totalorder %s159, %s161
      %p168 = scmp.eq.s32.totalorder %s27, 1
      %p169 = por %p167, %p168
      %p170 = scmp.ne.s32.totalorder %s161, %s162
      %p171 = scmp.eq.s32.totalorder %s27, 0
      %p172 = por %p170, %p171
      %p173 = scmp.ne.s32.totalorder %s161, %s162
      %p174 = scmp.eq.s32.totalorder %s28, 1
      %p175 = por %p173, %p174
      %p177 = scmp.ne.s32.totalorder %s162, %s176
      %p178 = scmp.eq.s32.totalorder %s28, 0
      %p179 = por %p177, %p178
      %s180 = ssub.s32 %s29, %s41
      %s181 = ssub.s32 %s30, %s37
      %s182 = sor.u32 %s180, %s181
      %p183 = scmp.eq.s32.totalorder %s182, 0
      %s185 = sadd.s32 %s184, 1
      %s186 = scalar_select %p183, %s184, %s185
      %p189 = pneg %p183
      %p190 = scmp.eq.s32.totalorder %s22, 1
      %p191 = por %p189, %p190
      %p192 = scmp.ne.s32.totalorder %s184, %s187
      %p193 = scmp.eq.s32.totalorder %s22, 0
      %p194 = por %p192, %p193
      %p195 = scmp.ne.s32.totalorder %s184, %s187
      %p196 = scmp.eq.s32.totalorder %s27, 1
      %p197 = por %p195, %p196
      %p198 = scmp.ne.s32.totalorder %s187, %s188
      %p199 = scmp.eq.s32.totalorder %s27, 0
      %p200 = por %p198, %p199
      %p201 = scmp.ne.s32.totalorder %s187, %s188
      %p202 = scmp.eq.s32.totalorder %s28, 1
      %p203 = por %p201, %p202
      %p205 = scmp.ne.s32.totalorder %s188, %s204
      %p206 = scmp.eq.s32.totalorder %s28, 0
      %p207 = por %p205, %p206
      %p208 = scmp.le.s32.totalorder 1, %s22
      %p209 = scmp.lt.s32.totalorder %s22, 3
      %p210 = pnand %p208, %p209
      %p211 = pneg %p210
      // Predicated region
      $region9: #{tpu_custom_call.1} parent=5 // pred_check
        _
      $region10: #{tpu_custom_call.1} parent=5 // pred_check_branch
        %213 = sbr.rel (%p210) target = $region12
      $region11: #{tpu_custom_call.1} parent=5 // pred_region
        %s214 = ssub.s32 %s22, 1
        // Predicated region
        $region13: #{tpu_custom_call.1} parent=11 // pred_check
          %p215 = pneg %p109
        $region14: #{tpu_custom_call.1} parent=11 // pred_check_branch
          %217 = sbr.rel (%p215) target = $region16
        $region15: #{tpu_custom_call.1} parent=11 // pred_region
          _
        $region16: #{tpu_custom_call.1} parent=11 // pred_fallthru
          _
        // Predicated region
        $region17: #{tpu_custom_call.1} parent=11 // pred_check
          %p218 = pneg %p130
        $region18: #{tpu_custom_call.1} parent=11 // pred_check_branch
          %220 = sbr.rel (%p218) target = $region20
        $region19: #{tpu_custom_call.1} parent=11 // pred_region
          %222 = vsyncadd [#allocation7], 0
          %s223 = sshll.u32 %s3, 4
          %s224 = int_to_ptr.hbm [resolvable:$true] %s223
          %s225 = sshll.u32 [#allocation8], 4
          %s226 = int_to_ptr.vmem [resolvable:$true] %s225
          %231 = dma.hbm_to_vmem [thread:$0]  %s224, 2048, %s226, [#allocation7], 128, 128, 8
        $region20: #{tpu_custom_call.1} parent=11 // pred_fallthru
          _
        // Predicated region
        $region21: #{tpu_custom_call.1} parent=11 // pred_check
          %p232 = pneg %p151
        $region22: #{tpu_custom_call.1} parent=11 // pred_check_branch
          %234 = sbr.rel (%p232) target = $region24
        $region23: #{tpu_custom_call.1} parent=11 // pred_region
          %236 = vsyncadd [#allocation10], 0
          %s237 = sshll.u32 %s4, 4
          %s238 = int_to_ptr.hbm [resolvable:$true] %s237
          %s239 = sshll.u32 [#allocation9], 4
          %s240 = int_to_ptr.vmem [resolvable:$true] %s239
          %245 = dma.hbm_to_vmem [thread:$0]  %s238, 4096, %s240, [#allocation10], 256, 256, 16
        $region24: #{tpu_custom_call.1} parent=11 // pred_fallthru
          _
        // Predicated region
        $region25: #{tpu_custom_call.1} parent=11 // pred_check
          %p246 = pneg %p172
        $region26: #{tpu_custom_call.1} parent=11 // pred_check_branch
          %248 = sbr.rel (%p246) target = $region28
        $region27: #{tpu_custom_call.1} parent=11 // pred_region
          %250 = vsyncadd [#allocation10], 0
          %s251 = sshll.u32 %s5, 4
          %s252 = int_to_ptr.hbm [resolvable:$true] %s251
          %s253 = sshll.u32 [#allocation11], 4
          %s254 = int_to_ptr.vmem [resolvable:$true] %s253
          %259 = dma.hbm_to_vmem [thread:$0]  %s252, 2048, %s254, [#allocation10], 128, 128, 8
        $region28: #{tpu_custom_call.1} parent=11 // pred_fallthru
          _
      $region12: #{tpu_custom_call.1} parent=5 // pred_fallthru
        _
      %p260 = scmp.lt.s32.totalorder %s22, 2
      // Predicated region
      $region29: #{tpu_custom_call.1} parent=5 // pred_check
        %p261 = pneg %p260
      $region30: #{tpu_custom_call.1} parent=5 // pred_check_branch
        %263 = sbr.rel (%p261) target = $region32
      $region31: #{tpu_custom_call.1} parent=5 // pred_region
        // Predicated region
        $region33: #{tpu_custom_call.1} parent=31 // pred_check
          %p264 = pneg %p56
        $region34: #{tpu_custom_call.1} parent=31 // pred_check_branch
          %266 = sbr.rel (%p264) target = $region36
        $region35: #{tpu_custom_call.1} parent=31 // pred_region
          %s267 = sand.u32 %s46, 1
          %s268 = scalar_lea.sflag [#allocation4], %s267
          %s269 = sand.u32 %s46, 1
          %s270 = smul.addr %s269, 8
          %s271 = scalar_lea.vmem [#allocation3], %s270
          %273 = vsyncadd %s268, 0
          %s274 = sadd.s32 %s30, %s29
          %s275 = smul.addr %s274, 8
          %s276 = scalar_lea.hbm %s0, %s275
          %s278 = sshll.u32 %s276, 4
          %s279 = int_to_ptr.hbm [resolvable:$true] %s278
          %s280 = sshll.u32 %s271, 4
          %s281 = int_to_ptr.vmem [resolvable:$true] %s280
          %283 = dma.hbm_to_vmem [thread:$0]  %s279, 128, %s281, %s268
        $region36: #{tpu_custom_call.1} parent=31 // pred_fallthru
          _
        // Predicated region
        $region37: #{tpu_custom_call.1} parent=31 // pred_check
          %p284 = pneg %p82
        $region38: #{tpu_custom_call.1} parent=31 // pred_check_branch
          %286 = sbr.rel (%p284) target = $region40
        $region39: #{tpu_custom_call.1} parent=31 // pred_region
          %s287 = sand.u32 %s22, 1
          %s288 = scalar_lea.sflag [#allocation7], %s287
          %s289 = sand.u32 %s72, 1
          %s290 = smul.addr %s289, 16
          %s291 = scalar_lea.vmem [#allocation6], %s290
          %293 = vsyncadd %s288, 0
          %s294 = smul.addr %s29, 2
          %s295 = smul.addr %s294, 8
          %s296 = scalar_lea.hbm %s1, %s295
          %s297 = sshll.u32 %s296, 4
          %s298 = int_to_ptr.hbm [resolvable:$true] %s297
          %s299 = sshll.u32 %s291, 4
          %s300 = int_to_ptr.vmem [resolvable:$true] %s299
          %305 = dma.hbm_to_vmem [thread:$0]  %s298, 256, %s300, %s288, 128, 128, 8
        $region40: #{tpu_custom_call.1} parent=31 // pred_fallthru
          _
      $region32: #{tpu_custom_call.1} parent=5 // pred_fallthru
        _
      %p306 = scmp.le.s32.totalorder 1, %s22
      %p307 = scmp.lt.s32.totalorder %s22, 3
      %p308 = pnand %p306, %p307
      %p309 = pneg %p308
      // Predicated region
      $region41: #{tpu_custom_call.1} parent=5 // pred_check
        _
      $region42: #{tpu_custom_call.1} parent=5 // pred_check_branch
        %311 = sbr.rel (%p308) target = $region44
      $region43: #{tpu_custom_call.1} parent=5 // pred_region
        %s312 = ssub.s32 %s22, 1
        %s313 = sand.u32 %s49, 1
        %s314 = scalar_lea.sflag [#allocation4], %s313
        %s315 = sand.u32 %s49, 1
        %s316 = smul.addr %s315, 8
        %s317 = scalar_lea.vmem [#allocation3], %s316
        // Predicated region
        $region45: #{tpu_custom_call.1} parent=43 // pred_check
          %p318 = pneg %p62
        $region46: #{tpu_custom_call.1} parent=43 // pred_check_branch
          %320 = sbr.rel (%p318) target = $region48
        $region47: #{tpu_custom_call.1} parent=43 // pred_region
          %322 = dma.done %s314, 128
        $region48: #{tpu_custom_call.1} parent=43 // pred_fallthru
          _
        %s323 = sand.u32 %s27, 1
        %s324 = scalar_lea.sflag [#allocation7], %s323
        %s325 = sand.u32 %s75, 1
        %s326 = smul.addr %s325, 16
        %s327 = scalar_lea.vmem [#allocation6], %s326
        // Predicated region
        $region49: #{tpu_custom_call.1} parent=43 // pred_check
          %p328 = pneg %p88
        $region50: #{tpu_custom_call.1} parent=43 // pred_check_branch
          %330 = sbr.rel (%p328) target = $region52
        $region51: #{tpu_custom_call.1} parent=43 // pred_region
          %332 = dma.done %s324, 256
        $region52: #{tpu_custom_call.1} parent=43 // pred_fallthru
          _
        // Predicated region
        $region53: #{tpu_custom_call.1} parent=43 // pred_check
          %p333 = pneg %p130
        $region54: #{tpu_custom_call.1} parent=43 // pred_check_branch
          %335 = sbr.rel (%p333) target = $region56
        $region55: #{tpu_custom_call.1} parent=43 // pred_region
          %337 = dma.done [#allocation7], 2048
        $region56: #{tpu_custom_call.1} parent=43 // pred_fallthru
          _
        // Predicated region
        $region57: #{tpu_custom_call.1} parent=43 // pred_check
          %p338 = pneg %p151
        $region58: #{tpu_custom_call.1} parent=43 // pred_check_branch
          %340 = sbr.rel (%p338) target = $region60
        $region59: #{tpu_custom_call.1} parent=43 // pred_region
          %342 = dma.done [#allocation10], 4096
        $region60: #{tpu_custom_call.1} parent=43 // pred_fallthru
          _
        // Predicated region
        $region61: #{tpu_custom_call.1} parent=43 // pred_check
          %p343 = pneg %p172
        $region62: #{tpu_custom_call.1} parent=43 // pred_check_branch
          %345 = sbr.rel (%p343) target = $region64
        $region63: #{tpu_custom_call.1} parent=43 // pred_region
          %347 = dma.done [#allocation10], 2048
        $region64: #{tpu_custom_call.1} parent=43 // pred_fallthru
          _
        %s348 = sand.u32 %s49, 1
        %s349 = scalar_lea.sflag [#allocation4], %s348
        %s350 = sand.u32 %s49, 1
        %s351 = smul.addr %s350, 8
        %s352 = scalar_lea.vmem [#allocation3], %s351
        %p353 = pneg %p62
        %p354 = pneg %p59
        %s355 = sand.u32 %s27, 1
        %s356 = scalar_lea.sflag [#allocation7], %s355
        %s357 = sand.u32 %s75, 1
        %s358 = smul.addr %s357, 16
        %s359 = scalar_lea.vmem [#allocation6], %s358
        %p360 = pneg %p88
        %p361 = pneg %p85
        %p362 = pneg %p109
        %p363 = pneg %p106
        %p364 = pneg %p130
        %p365 = pneg %p127
        %p366 = pneg %p151
        %p367 = pneg %p148
        %p368 = pneg %p172
        %p369 = pneg %p169
        %p370 = pneg %p200
        %p371 = pneg %p197
        %s372 = sand.u32 %s187, 1
        %s373 = scalar_lea.sflag [#allocation5], %s372
        %s374 = sand.u32 %s187, 1
        %s375 = smul.addr %s374, 8
        %s376 = scalar_lea.vmem [#allocation12], %s375
        %p377 = scmp.eq.s32.totalorder %s32, 0
        // Predicated region
        $region65: #{tpu_custom_call.1} parent=43 // pred_check
          %p378 = pneg %p377
        $region66: #{tpu_custom_call.1} parent=43 // pred_check_branch
          %380 = sbr.rel (%p378) target = $region68
        $region67: #{tpu_custom_call.1} parent=43 // pred_region
          %v381 = vld [vmem:[%s327] sm:$0xff]
          %v382 = vld [vmem:[%s327 + $0x8] sm:$0xff]
          %v383 = vld [vmem:[#allocation9] sm:$0xff]
          %v384 = vld [vmem:[#allocation9 + $0x8] sm:$0xff]
          %v385 = vld [vmem:[#allocation9 + $0x10] sm:$0xff]
          %v386 = vld [vmem:[#allocation9 + $0x18] sm:$0xff]
          %v387 = vld [vmem:[#allocation9 + $0x20] sm:$0xff]
          %v388 = vld [vmem:[#allocation9 + $0x28] sm:$0xff]
          %v389 = vld [vmem:[#allocation9 + $0x30] sm:$0xff]
          %v390 = vld [vmem:[#allocation9 + $0x38] sm:$0xff]
          %v391 = vld [vmem:[#allocation9 + $0x40] sm:$0xff]
          %v392 = vld [vmem:[#allocation9 + $0x48] sm:$0xff]
          %v393 = vld [vmem:[#allocation9 + $0x50] sm:$0xff]
          %v394 = vld [vmem:[#allocation9 + $0x58] sm:$0xff]
          %v395 = vld [vmem:[#allocation9 + $0x60] sm:$0xff]
          %v396 = vld [vmem:[#allocation9 + $0x68] sm:$0xff]
          %v397 = vld [vmem:[#allocation9 + $0x70] sm:$0xff]
          %v398 = vld [vmem:[#allocation9 + $0x78] sm:$0xff]
          %v399 = vld [vmem:[#allocation9 + $0x80] sm:$0xff]
          %v400 = vld [vmem:[#allocation9 + $0x88] sm:$0xff]
          %v401 = vld [vmem:[#allocation9 + $0x90] sm:$0xff]
          %v402 = vld [vmem:[#allocation9 + $0x98] sm:$0xff]
          %v403 = vld [vmem:[#allocation9 + $0xa0] sm:$0xff]
          %v404 = vld [vmem:[#allocation9 + $0xa8] sm:$0xff]
          %v405 = vld [vmem:[#allocation9 + $0xb0] sm:$0xff]
          %v406 = vld [vmem:[#allocation9 + $0xb8] sm:$0xff]
          %v407 = vld [vmem:[#allocation9 + $0xc0] sm:$0xff]
          %v408 = vld [vmem:[#allocation9 + $0xc8] sm:$0xff]
          %v409 = vld [vmem:[#allocation9 + $0xd0] sm:$0xff]
          %v410 = vld [vmem:[#allocation9 + $0xd8] sm:$0xff]
          %v411 = vld [vmem:[#allocation9 + $0xe0] sm:$0xff]
          %v412 = vld [vmem:[#allocation9 + $0xe8] sm:$0xff]
          %v413 = vld [vmem:[#allocation9 + $0xf0] sm:$0xff]
          %v414 = vld [vmem:[#allocation9 + $0xf8] sm:$0xff]
          %415 = vmatpush.msra.mxu0 %v413
          %416 = vmatpush.msra.mxu0 %v411
          %417 = vmatpush.msra.mxu0 %v409
          %418 = vmatpush.msra.mxu0 %v407
          %419 = vmatpush.msra.mxu0 %v405
          %420 = vmatpush.msra.mxu0 %v403
          %421 = vmatpush.msra.mxu0 %v401
          %422 = vmatpush.msra.mxu0 %v399
          %423 = vmatpush.msra.mxu0 %v397
          %424 = vmatpush.msra.mxu0 %v395
          %425 = vmatpush.msra.mxu0 %v393
          %426 = vmatpush.msra.mxu0 %v391
          %427 = vmatpush.msra.mxu0 %v389
          %428 = vmatpush.msra.mxu0 %v387
          %429 = vmatpush.msra.mxu0 %v385
          %430 = vmatpush.msra.mxu0 %v383
          %431 = vmatmul.f32.gmra.mxu0 %v381
          %v432 = vpop.f32.mrf.mxu0
          %v433 = vadd.f32 0.0, %v432
          %434 = vmatmul.f32.gmra.mxu0 %v382
          %v435 = vpop.f32.mrf.mxu0
          %v436 = vadd.f32 0.0, %v435
          %437 = vdwg.mxu0
          %438 = vmatpush.msra.mxu0 %v414
          %439 = vmatpush.msra.mxu0 %v412
          %440 = vmatpush.msra.mxu0 %v410
          %441 = vmatpush.msra.mxu0 %v408
          %442 = vmatpush.msra.mxu0 %v406
          %443 = vmatpush.msra.mxu0 %v404
          %444 = vmatpush.msra.mxu0 %v402
          %445 = vmatpush.msra.mxu0 %v400
          %446 = vmatpush.msra.mxu0 %v398
          %447 = vmatpush.msra.mxu0 %v396
          %448 = vmatpush.msra.mxu0 %v394
          %449 = vmatpush.msra.mxu0 %v392
          %450 = vmatpush.msra.mxu0 %v390
          %451 = vmatpush.msra.mxu0 %v388
          %452 = vmatpush.msra.mxu0 %v386
          %453 = vmatpush.msra.mxu0 %v384
          %454 = vmatmul.f32.gmra.mxu0 %v381
          %v455 = vpop.f32.mrf.mxu0
          %v456 = vadd.f32 0.0, %v455
          %457 = vmatmul.f32.gmra.mxu0 %v382
          %v458 = vpop.f32.mrf.mxu0
          %v459 = vadd.f32 0.0, %v458
          %460 = vdwg.mxu0
          %461 = vst [vmem:[#allocation2] sm:$0xff] %v433
          %462 = vst [vmem:[#allocation2 + $0x8] sm:$0xff] %v456
          %463 = vst [vmem:[#allocation2 + $0x10] sm:$0xff] %v436
          %464 = vst [vmem:[#allocation2 + $0x18] sm:$0xff] %v459
        $region68: #{tpu_custom_call.1} parent=43 // pred_fallthru
          _
        %v465 = vld [vmem:[%s317] sm:$0xff]
        %v466 = vmul.f32 %v465, %v465
        %467 = vadd.xlane.f32.xlu0 %v466
        %v468 = vpop.xlane.xlu0 %467
        %v469 = vrcp.pop 128.0
        %v470 = vmul.f32 128.0, %v469
        %v471 = vsub.f32 1.0, %v470
        %v472 = vmul.f32 %v469, %v471
        %v473 = vadd.f32 %v469, %v472
        %vm474 = vweird.f32 %v469
        %v475 = vsel %vm474, %v469, %v473
        %v476 = vmul.f32 %v468, %v475
        %v477 = vld [vmem:[%s2] sm:$0x1]
        %v478 = vadd.f32 %v476, 1e-06
        %v479 = vrsqrt.pop %v478
        %v480 = vmul.f32 %v479, %v478
        %v481 = vmul.f32 %v480, %v479
        %v482 = vmul.f32 0.5, %v481
        %v483 = vsub.f32 1.5, %v482
        %v484 = vmul.f32 %v479, %v483
        %vm485 = vweird.f32 %v478
        %vm486 = vweird.f32 %v479
        %vm487 = vmor %vm485, %vm486
        %v488 = vsel %vm487, %v479, %v484
        %v489 = vmul.f32 %v465, %v488
        %v491 = vperm.slane %v477, 0
        %v493 = vmul.f32 %v491, %v489
        %v494 = vld [vmem:[#allocation8] sm:$0xff]
        %v495 = vld [vmem:[#allocation8 + $0x8] sm:$0xff]
        %v496 = vld [vmem:[#allocation8 + $0x10] sm:$0xff]
        %v497 = vld [vmem:[#allocation8 + $0x18] sm:$0xff]
        %v498 = vld [vmem:[#allocation8 + $0x20] sm:$0xff]
        %v499 = vld [vmem:[#allocation8 + $0x28] sm:$0xff]
        %v500 = vld [vmem:[#allocation8 + $0x30] sm:$0xff]
        %v501 = vld [vmem:[#allocation8 + $0x38] sm:$0xff]
        %v502 = vld [vmem:[#allocation8 + $0x40] sm:$0xff]
        %v503 = vld [vmem:[#allocation8 + $0x48] sm:$0xff]
        %v504 = vld [vmem:[#allocation8 + $0x50] sm:$0xff]
        %v505 = vld [vmem:[#allocation8 + $0x58] sm:$0xff]
        %v506 = vld [vmem:[#allocation8 + $0x60] sm:$0xff]
        %v507 = vld [vmem:[#allocation8 + $0x68] sm:$0xff]
        %v508 = vld [vmem:[#allocation8 + $0x70] sm:$0xff]
        %v509 = vld [vmem:[#allocation8 + $0x78] sm:$0xff]
        %510 = vmatpush.msra.mxu0 %v509
        %511 = vmatpush.msra.mxu0 %v508
        %512 = vmatpush.msra.mxu0 %v507
        %513 = vmatpush.msra.mxu0 %v506
        %514 = vmatpush.msra.mxu0 %v505
        %515 = vmatpush.msra.mxu0 %v504
        %516 = vmatpush.msra.mxu0 %v503
        %517 = vmatpush.msra.mxu0 %v502
        %518 = vmatpush.msra.mxu0 %v501
        %519 = vmatpush.msra.mxu0 %v500
        %520 = vmatpush.msra.mxu0 %v499
        %521 = vmatpush.msra.mxu0 %v498
        %522 = vmatpush.msra.mxu0 %v497
        %523 = vmatpush.msra.mxu0 %v496
        %524 = vmatpush.msra.mxu0 %v495
        %525 = vmatpush.msra.mxu0 %v494
        %526 = vmatmul.f32.gmra.mxu0 %v493
        %v527 = vpop.f32.mrf.mxu0
        %v528 = vadd.f32 0.0, %v527
        %529 = vdwg.mxu0
        %v530 = vld [vmem:[#allocation2] sm:$0xff]
        %v531 = vld [vmem:[#allocation2 + $0x8] sm:$0xff]
        %v532 = vld [vmem:[#allocation2 + $0x10] sm:$0xff]
        %v533 = vld [vmem:[#allocation2 + $0x18] sm:$0xff]
        %535 = vrot.lane.b32.xlu0 %v528, 96
        %v536 = vpop.permute.xlu0 %535
        %538 = vrot.lane.b32.xlu0 %v528, 64
        %v539 = vpop.permute.xlu0 %538
        %541 = vrot.lane.b32.xlu0 %v528, 32
        %v542 = vpop.permute.xlu0 %541
        %v544 = vrot.slane %v539, 4
        %vm545 = vcmask 1047556
        %v546 = vsel %vm545, %v544, %v528
        %v547 = vrot.slane %v528, 4
        %v548 = vsel %vm545, %v539, %v547
        %v550 = vunpack.c.l.s4 1983009808
        %v551 = vunpack.c.0.s8 %v550
        %v552 = vperm.slane %v546, %v551
        %v554 = vunpack.c.l.s4 1983009808
        %v555 = vunpack.c.0.s8 %v554
        %v556 = vperm.slane %v548, %v555
        %v557 = vrot.slane %v542, 4
        %v558 = vsel %vm545, %v557, %v536
        %v559 = vrot.slane %v536, 4
        %v560 = vsel %vm545, %v542, %v559
        %v562 = vunpack.c.l.s4 1983009808
        %v563 = vunpack.c.0.s8 %v562
        %v564 = vperm.slane %v558, %v563
        %v566 = vunpack.c.l.s4 1983009808
        %v567 = vunpack.c.0.s8 %v566
        %v568 = vperm.slane %v560, %v567
        %v569 = vrot.slane %v564, 4
        %v570 = vsel %vm545, %v569, %v552
        %v571 = vrot.slane %v552, 4
        %v572 = vsel %vm545, %v564, %v571
        %v574 = vunpack.c.l.s4 1934713408
        %v575 = vunpack.c.0.s8 %v574
        %v576 = vperm.slane %v570, %v575
        %v578 = vunpack.c.l.s4 1934713408
        %v579 = vunpack.c.0.s8 %v578
        %v580 = vperm.slane %v572, %v579
        %v581 = vrot.slane %v568, 4
        %v582 = vsel %vm545, %v581, %v556
        %v583 = vrot.slane %v556, 4
        %v584 = vsel %vm545, %v568, %v583
        %v586 = vunpack.c.l.s4 1934713408
        %v587 = vunpack.c.0.s8 %v586
        %v588 = vperm.slane %v582, %v587
        %v590 = vunpack.c.l.s4 1934713408
        %v591 = vunpack.c.0.s8 %v590
        %v592 = vperm.slane %v584, %v591
        %v593 = vrot.slane %v576, 4
        %v594 = vsel %vm545, 0.0, %v593
        %v595 = vrot.slane %v580, 4
        %v596 = vsel %vm545, 0.0, %v595
        %v597 = vrot.slane %v588, 4
        %v598 = vsel %vm545, 0.0, %v597
        %v599 = vrot.slane %v592, 4
        %v600 = vsel %vm545, 0.0, %v599
        %v601 = vsel %vm545, %v595, %v576
        %v603 = vunpack.c.l.s4 1983009808
        %v604 = vunpack.c.0.s8 %v603
        %v605 = vperm.slane %v601, %v604
        %v606 = vrot.slane %v596, 4
        %v607 = vsel %vm545, %v606, %v594
        %v609 = vunpack.c.l.s4 1983009808
        %v610 = vunpack.c.0.s8 %v609
        %v611 = vperm.slane %v607, %v610
        %v612 = vsel %vm545, %v599, %v588
        %v614 = vunpack.c.l.s4 1983009808
        %v615 = vunpack.c.0.s8 %v614
        %v616 = vperm.slane %v612, %v615
        %v617 = vrot.slane %v600, 4
        %v618 = vsel %vm545, %v617, %v598
        %v620 = vunpack.c.l.s4 1983009808
        %v621 = vunpack.c.0.s8 %v620
        %v622 = vperm.slane %v618, %v621
        %v623 = vrot.slane %v611, 4
        %v624 = vsel %vm545, %v623, %v605
        %v625 = vrot.slane %v605, 4
        %v626 = vsel %vm545, %v611, %v625
        %v628 = vunpack.c.l.s4 1934713408
        %v629 = vunpack.c.0.s8 %v628
        %v630 = vperm.slane %v624, %v629
        %v632 = vunpack.c.l.s4 1934713408
        %v633 = vunpack.c.0.s8 %v632
        %v634 = vperm.slane %v626, %v633
        %v635 = vrot.slane %v622, 4
        %v636 = vsel %vm545, %v635, %v616
        %v637 = vrot.slane %v616, 4
        %v638 = vsel %vm545, %v622, %v637
        %v640 = vunpack.c.l.s4 1934713408
        %v641 = vunpack.c.0.s8 %v640
        %v642 = vperm.slane %v636, %v641
        %v644 = vunpack.c.l.s4 1934713408
        %v645 = vunpack.c.0.s8 %v644
        %v646 = vperm.slane %v638, %v645
        %v647 = vrot.slane %v642, 4
        %v648 = vsel %vm545, %v647, %v630
        %v649 = vrot.slane %v630, 4
        %v650 = vsel %vm545, %v642, %v649
        %v651 = vrot.slane %v646, 4
        %v652 = vsel %vm545, %v651, %v634
        %v653 = vrot.slane %v634, 4
        %v654 = vsel %vm545, %v646, %v653
        %657 = vrot.lane.b32.xlu0 %v530, 96
        %v658 = vpop.permute.xlu0 %657
        %659 = vrot.lane.b32.xlu0 %v532, 96
        %v660 = vpop.permute.xlu0 %659
        %663 = vrot.lane.b32.xlu0 %v530, 64
        %v664 = vpop.permute.xlu0 %663
        %665 = vrot.lane.b32.xlu0 %v532, 64
        %v666 = vpop.permute.xlu0 %665
        %669 = vrot.lane.b32.xlu0 %v530, 32
        %v670 = vpop.permute.xlu0 %669
        %671 = vrot.lane.b32.xlu0 %v532, 32
        %v672 = vpop.permute.xlu0 %671
        %v675 = vrot.slane %v664, 4
        %v676 = vsel %vm545, %v675, %v530
        %v677 = vrot.slane %v530, 4
        %v678 = vsel %vm545, %v664, %v677
        %v680 = vunpack.c.l.s4 1983009808
        %v681 = vunpack.c.0.s8 %v680
        %v682 = vperm.slane %v676, %v681
        %v684 = vunpack.c.l.s4 1983009808
        %v685 = vunpack.c.0.s8 %v684
        %v686 = vperm.slane %v678, %v685
        %v687 = vrot.slane %v670, 4
        %v688 = vsel %vm545, %v687, %v658
        %v689 = vrot.slane %v658, 4
        %v690 = vsel %vm545, %v670, %v689
        %v692 = vunpack.c.l.s4 1983009808
        %v693 = vunpack.c.0.s8 %v692
        %v694 = vperm.slane %v688, %v693
        %v696 = vunpack.c.l.s4 1983009808
        %v697 = vunpack.c.0.s8 %v696
        %v698 = vperm.slane %v690, %v697
        %v699 = vrot.slane %v694, 4
        %v700 = vsel %vm545, %v699, %v682
        %v701 = vrot.slane %v682, 4
        %v702 = vsel %vm545, %v694, %v701
        %v704 = vunpack.c.l.s4 1934713408
        %v705 = vunpack.c.0.s8 %v704
        %v706 = vperm.slane %v700, %v705
        %v708 = vunpack.c.l.s4 1934713408
        %v709 = vunpack.c.0.s8 %v708
        %v710 = vperm.slane %v702, %v709
        %v711 = vrot.slane %v698, 4
        %v712 = vsel %vm545, %v711, %v686
        %v713 = vrot.slane %v686, 4
        %v714 = vsel %vm545, %v698, %v713
        %v716 = vunpack.c.l.s4 1934713408
        %v717 = vunpack.c.0.s8 %v716
        %v718 = vperm.slane %v712, %v717
        %v720 = vunpack.c.l.s4 1934713408
        %v721 = vunpack.c.0.s8 %v720
        %v722 = vperm.slane %v714, %v721
        %v723 = vrot.slane %v706, 4
        %v724 = vsel %vm545, 0.0, %v723
        %v725 = vrot.slane %v710, 4
        %v726 = vsel %vm545, 0.0, %v725
        %v727 = vrot.slane %v718, 4
        %v728 = vsel %vm545, 0.0, %v727
        %v729 = vrot.slane %v722, 4
        %v730 = vsel %vm545, 0.0, %v729
        %v731 = vrot.slane %v666, 4
        %v732 = vsel %vm545, %v731, %v532
        %v733 = vrot.slane %v532, 4
        %v734 = vsel %vm545, %v666, %v733
        %v736 = vunpack.c.l.s4 1983009808
        %v737 = vunpack.c.0.s8 %v736
        %v738 = vperm.slane %v732, %v737
        %v740 = vunpack.c.l.s4 1983009808
        %v741 = vunpack.c.0.s8 %v740
        %v742 = vperm.slane %v734, %v741
        %v743 = vrot.slane %v672, 4
        %v744 = vsel %vm545, %v743, %v660
        %v745 = vrot.slane %v660, 4
        %v746 = vsel %vm545, %v672, %v745
        %v748 = vunpack.c.l.s4 1983009808
        %v749 = vunpack.c.0.s8 %v748
        %v750 = vperm.slane %v744, %v749
        %v752 = vunpack.c.l.s4 1983009808
        %v753 = vunpack.c.0.s8 %v752
        %v754 = vperm.slane %v746, %v753
        %v755 = vrot.slane %v750, 4
        %v756 = vsel %vm545, %v755, %v738
        %v757 = vrot.slane %v738, 4
        %v758 = vsel %vm545, %v750, %v757
        %v760 = vunpack.c.l.s4 1934713408
        %v761 = vunpack.c.0.s8 %v760
        %v762 = vperm.slane %v756, %v761
        %v764 = vunpack.c.l.s4 1934713408
        %v765 = vunpack.c.0.s8 %v764
        %v766 = vperm.slane %v758, %v765
        %v767 = vrot.slane %v754, 4
        %v768 = vsel %vm545, %v767, %v742
        %v769 = vrot.slane %v742, 4
        %v770 = vsel %vm545, %v754, %v769
        %v772 = vunpack.c.l.s4 1934713408
        %v773 = vunpack.c.0.s8 %v772
        %v774 = vperm.slane %v768, %v773
        %v776 = vunpack.c.l.s4 1934713408
        %v777 = vunpack.c.0.s8 %v776
        %v778 = vperm.slane %v770, %v777
        %v779 = vrot.slane %v762, 4
        %v780 = vsel %vm545, 0.0, %v779
        %v781 = vrot.slane %v766, 4
        %v782 = vsel %vm545, 0.0, %v781
        %v783 = vrot.slane %v774, 4
        %v784 = vsel %vm545, 0.0, %v783
        %v785 = vrot.slane %v778, 4
        %v786 = vsel %vm545, 0.0, %v785
        %v787 = vsel %vm545, %v725, %v706
        %v789 = vunpack.c.l.s4 1983009808
        %v790 = vunpack.c.0.s8 %v789
        %v791 = vperm.slane %v787, %v790
        %v792 = vrot.slane %v726, 4
        %v793 = vsel %vm545, %v792, %v724
        %v795 = vunpack.c.l.s4 1983009808
        %v796 = vunpack.c.0.s8 %v795
        %v797 = vperm.slane %v793, %v796
        %v798 = vsel %vm545, %v729, %v718
        %v800 = vunpack.c.l.s4 1983009808
        %v801 = vunpack.c.0.s8 %v800
        %v802 = vperm.slane %v798, %v801
        %v803 = vrot.slane %v730, 4
        %v804 = vsel %vm545, %v803, %v728
        %v806 = vunpack.c.l.s4 1983009808
        %v807 = vunpack.c.0.s8 %v806
        %v808 = vperm.slane %v804, %v807
        %v809 = vrot.slane %v797, 4
        %v810 = vsel %vm545, %v809, %v791
        %v811 = vrot.slane %v791, 4
        %v812 = vsel %vm545, %v797, %v811
        %v814 = vunpack.c.l.s4 1934713408
        %v815 = vunpack.c.0.s8 %v814
        %v816 = vperm.slane %v810, %v815
        %v818 = vunpack.c.l.s4 1934713408
        %v819 = vunpack.c.0.s8 %v818
        %v820 = vperm.slane %v812, %v819
        %v821 = vrot.slane %v808, 4
        %v822 = vsel %vm545, %v821, %v802
        %v823 = vrot.slane %v802, 4
        %v824 = vsel %vm545, %v808, %v823
        %v826 = vunpack.c.l.s4 1934713408
        %v827 = vunpack.c.0.s8 %v826
        %v828 = vperm.slane %v822, %v827
        %v830 = vunpack.c.l.s4 1934713408
        %v831 = vunpack.c.0.s8 %v830
        %v832 = vperm.slane %v824, %v831
        %v833 = vrot.slane %v828, 4
        %v834 = vsel %vm545, %v833, %v816
        %v835 = vrot.slane %v816, 4
        %v836 = vsel %vm545, %v828, %v835
        %v837 = vrot.slane %v832, 4
        %v838 = vsel %vm545, %v837, %v820
        %v839 = vrot.slane %v820, 4
        %v840 = vsel %vm545, %v832, %v839
        %v841 = vsel %vm545, %v781, %v762
        %v843 = vunpack.c.l.s4 1983009808
        %v844 = vunpack.c.0.s8 %v843
        %v845 = vperm.slane %v841, %v844
        %v846 = vrot.slane %v782, 4
        %v847 = vsel %vm545, %v846, %v780
        %v849 = vunpack.c.l.s4 1983009808
        %v850 = vunpack.c.0.s8 %v849
        %v851 = vperm.slane %v847, %v850
        %v852 = vsel %vm545, %v785, %v774
        %v854 = vunpack.c.l.s4 1983009808
        %v855 = vunpack.c.0.s8 %v854
        %v856 = vperm.slane %v852, %v855
        %v857 = vrot.slane %v786, 4
        %v858 = vsel %vm545, %v857, %v784
        %v860 = vunpack.c.l.s4 1983009808
        %v861 = vunpack.c.0.s8 %v860
        %v862 = vperm.slane %v858, %v861
        %v863 = vrot.slane %v851, 4
        %v864 = vsel %vm545, %v863, %v845
        %v865 = vrot.slane %v845, 4
        %v866 = vsel %vm545, %v851, %v865
        %v868 = vunpack.c.l.s4 1934713408
        %v869 = vunpack.c.0.s8 %v868
        %v870 = vperm.slane %v864, %v869
        %v872 = vunpack.c.l.s4 1934713408
        %v873 = vunpack.c.0.s8 %v872
        %v874 = vperm.slane %v866, %v873
        %v875 = vrot.slane %v862, 4
        %v876 = vsel %vm545, %v875, %v856
        %v877 = vrot.slane %v856, 4
        %v878 = vsel %vm545, %v862, %v877
        %v880 = vunpack.c.l.s4 1934713408
        %v881 = vunpack.c.0.s8 %v880
        %v882 = vperm.slane %v876, %v881
        %v884 = vunpack.c.l.s4 1934713408
        %v885 = vunpack.c.0.s8 %v884
        %v886 = vperm.slane %v878, %v885
        %v887 = vrot.slane %v882, 4
        %v888 = vsel %vm545, %v887, %v870
        %v889 = vrot.slane %v870, 4
        %v890 = vsel %vm545, %v882, %v889
        %v891 = vrot.slane %v886, 4
        %v892 = vsel %vm545, %v891, %v874
        %v893 = vrot.slane %v874, 4
        %v894 = vsel %vm545, %v886, %v893
        %897 = vrot.lane.b32.xlu0 %v531, 96
        %v898 = vpop.permute.xlu0 %897
        %899 = vrot.lane.b32.xlu0 %v533, 96
        %v900 = vpop.permute.xlu0 %899
        %903 = vrot.lane.b32.xlu0 %v531, 64
        %v904 = vpop.permute.xlu0 %903
        %905 = vrot.lane.b32.xlu0 %v533, 64
        %v906 = vpop.permute.xlu0 %905
        %909 = vrot.lane.b32.xlu0 %v531, 32
        %v910 = vpop.permute.xlu0 %909
        %911 = vrot.lane.b32.xlu0 %v533, 32
        %v912 = vpop.permute.xlu0 %911
        %v915 = vrot.slane %v904, 4
        %v916 = vsel %vm545, %v915, %v531
        %v917 = vrot.slane %v531, 4
        %v918 = vsel %vm545, %v904, %v917
        %v920 = vunpack.c.l.s4 1983009808
        %v921 = vunpack.c.0.s8 %v920
        %v922 = vperm.slane %v916, %v921
        %v924 = vunpack.c.l.s4 1983009808
        %v925 = vunpack.c.0.s8 %v924
        %v926 = vperm.slane %v918, %v925
        %v927 = vrot.slane %v910, 4
        %v928 = vsel %vm545, %v927, %v898
        %v929 = vrot.slane %v898, 4
        %v930 = vsel %vm545, %v910, %v929
        %v932 = vunpack.c.l.s4 1983009808
        %v933 = vunpack.c.0.s8 %v932
        %v934 = vperm.slane %v928, %v933
        %v936 = vunpack.c.l.s4 1983009808
        %v937 = vunpack.c.0.s8 %v936
        %v938 = vperm.slane %v930, %v937
        %v939 = vrot.slane %v934, 4
        %v940 = vsel %vm545, %v939, %v922
        %v941 = vrot.slane %v922, 4
        %v942 = vsel %vm545, %v934, %v941
        %v944 = vunpack.c.l.s4 1934713408
        %v945 = vunpack.c.0.s8 %v944
        %v946 = vperm.slane %v940, %v945
        %v948 = vunpack.c.l.s4 1934713408
        %v949 = vunpack.c.0.s8 %v948
        %v950 = vperm.slane %v942, %v949
        %v951 = vrot.slane %v938, 4
        %v952 = vsel %vm545, %v951, %v926
        %v953 = vrot.slane %v926, 4
        %v954 = vsel %vm545, %v938, %v953
        %v956 = vunpack.c.l.s4 1934713408
        %v957 = vunpack.c.0.s8 %v956
        %v958 = vperm.slane %v952, %v957
        %v960 = vunpack.c.l.s4 1934713408
        %v961 = vunpack.c.0.s8 %v960
        %v962 = vperm.slane %v954, %v961
        %v963 = vrot.slane %v946, 4
        %v964 = vsel %vm545, 0.0, %v963
        %v965 = vrot.slane %v950, 4
        %v966 = vsel %vm545, 0.0, %v965
        %v967 = vrot.slane %v958, 4
        %v968 = vsel %vm545, 0.0, %v967
        %v969 = vrot.slane %v962, 4
        %v970 = vsel %vm545, 0.0, %v969
        %v971 = vrot.slane %v906, 4
        %v972 = vsel %vm545, %v971, %v533
        %v973 = vrot.slane %v533, 4
        %v974 = vsel %vm545, %v906, %v973
        %v976 = vunpack.c.l.s4 1983009808
        %v977 = vunpack.c.0.s8 %v976
        %v978 = vperm.slane %v972, %v977
        %v980 = vunpack.c.l.s4 1983009808
        %v981 = vunpack.c.0.s8 %v980
        %v982 = vperm.slane %v974, %v981
        %v983 = vrot.slane %v912, 4
        %v984 = vsel %vm545, %v983, %v900
        %v985 = vrot.slane %v900, 4
        %v986 = vsel %vm545, %v912, %v985
        %v988 = vunpack.c.l.s4 1983009808
        %v989 = vunpack.c.0.s8 %v988
        %v990 = vperm.slane %v984, %v989
        %v992 = vunpack.c.l.s4 1983009808
        %v993 = vunpack.c.0.s8 %v992
        %v994 = vperm.slane %v986, %v993
        %v995 = vrot.slane %v990, 4
        %v996 = vsel %vm545, %v995, %v978
        %v997 = vrot.slane %v978, 4
        %v998 = vsel %vm545, %v990, %v997
        %v1000 = vunpack.c.l.s4 1934713408
        %v1001 = vunpack.c.0.s8 %v1000
        %v1002 = vperm.slane %v996, %v1001
        %v1004 = vunpack.c.l.s4 1934713408
        %v1005 = vunpack.c.0.s8 %v1004
        %v1006 = vperm.slane %v998, %v1005
        %v1007 = vrot.slane %v994, 4
        %v1008 = vsel %vm545, %v1007, %v982
        %v1009 = vrot.slane %v982, 4
        %v1010 = vsel %vm545, %v994, %v1009
        %v1012 = vunpack.c.l.s4 1934713408
        %v1013 = vunpack.c.0.s8 %v1012
        %v1014 = vperm.slane %v1008, %v1013
        %v1016 = vunpack.c.l.s4 1934713408
        %v1017 = vunpack.c.0.s8 %v1016
        %v1018 = vperm.slane %v1010, %v1017
        %v1019 = vrot.slane %v1002, 4
        %v1020 = vsel %vm545, 0.0, %v1019
        %v1021 = vrot.slane %v1006, 4
        %v1022 = vsel %vm545, 0.0, %v1021
        %v1023 = vrot.slane %v1014, 4
        %v1024 = vsel %vm545, 0.0, %v1023
        %v1025 = vrot.slane %v1018, 4
        %v1026 = vsel %vm545, 0.0, %v1025
        %v1027 = vsel %vm545, %v965, %v946
        %v1029 = vunpack.c.l.s4 1983009808
        %v1030 = vunpack.c.0.s8 %v1029
        %v1031 = vperm.slane %v1027, %v1030
        %v1032 = vrot.slane %v966, 4
        %v1033 = vsel %vm545, %v1032, %v964
        %v1035 = vunpack.c.l.s4 1983009808
        %v1036 = vunpack.c.0.s8 %v1035
        %v1037 = vperm.slane %v1033, %v1036
        %v1038 = vsel %vm545, %v969, %v958
        %v1040 = vunpack.c.l.s4 1983009808
        %v1041 = vunpack.c.0.s8 %v1040
        %v1042 = vperm.slane %v1038, %v1041
        %v1043 = vrot.slane %v970, 4
        %v1044 = vsel %vm545, %v1043, %v968
        %v1046 = vunpack.c.l.s4 1983009808
        %v1047 = vunpack.c.0.s8 %v1046
        %v1048 = vperm.slane %v1044, %v1047
        %v1049 = vrot.slane %v1037, 4
        %v1050 = vsel %vm545, %v1049, %v1031
        %v1051 = vrot.slane %v1031, 4
        %v1052 = vsel %vm545, %v1037, %v1051
        %v1054 = vunpack.c.l.s4 1934713408
        %v1055 = vunpack.c.0.s8 %v1054
        %v1056 = vperm.slane %v1050, %v1055
        %v1058 = vunpack.c.l.s4 1934713408
        %v1059 = vunpack.c.0.s8 %v1058
        %v1060 = vperm.slane %v1052, %v1059
        %v1061 = vrot.slane %v1048, 4
        %v1062 = vsel %vm545, %v1061, %v1042
        %v1063 = vrot.slane %v1042, 4
        %v1064 = vsel %vm545, %v1048, %v1063
        %v1066 = vunpack.c.l.s4 1934713408
        %v1067 = vunpack.c.0.s8 %v1066
        %v1068 = vperm.slane %v1062, %v1067
        %v1070 = vunpack.c.l.s4 1934713408
        %v1071 = vunpack.c.0.s8 %v1070
        %v1072 = vperm.slane %v1064, %v1071
        %v1073 = vrot.slane %v1068, 4
        %v1074 = vsel %vm545, %v1073, %v1056
        %v1075 = vrot.slane %v1056, 4
        %v1076 = vsel %vm545, %v1068, %v1075
        %v1077 = vrot.slane %v1072, 4
        %v1078 = vsel %vm545, %v1077, %v1060
        %v1079 = vrot.slane %v1060, 4
        %v1080 = vsel %vm545, %v1072, %v1079
        %v1081 = vsel %vm545, %v1021, %v1002
        %v1083 = vunpack.c.l.s4 1983009808
        %v1084 = vunpack.c.0.s8 %v1083
        %v1085 = vperm.slane %v1081, %v1084
        %v1086 = vrot.slane %v1022, 4
        %v1087 = vsel %vm545, %v1086, %v1020
        %v1089 = vunpack.c.l.s4 1983009808
        %v1090 = vunpack.c.0.s8 %v1089
        %v1091 = vperm.slane %v1087, %v1090
        %v1092 = vsel %vm545, %v1025, %v1014
        %v1094 = vunpack.c.l.s4 1983009808
        %v1095 = vunpack.c.0.s8 %v1094
        %v1096 = vperm.slane %v1092, %v1095
        %v1097 = vrot.slane %v1026, 4
        %v1098 = vsel %vm545, %v1097, %v1024
        %v1100 = vunpack.c.l.s4 1983009808
        %v1101 = vunpack.c.0.s8 %v1100
        %v1102 = vperm.slane %v1098, %v1101
        %v1103 = vrot.slane %v1091, 4
        %v1104 = vsel %vm545, %v1103, %v1085
        %v1105 = vrot.slane %v1085, 4
        %v1106 = vsel %vm545, %v1091, %v1105
        %v1108 = vunpack.c.l.s4 1934713408
        %v1109 = vunpack.c.0.s8 %v1108
        %v1110 = vperm.slane %v1104, %v1109
        %v1112 = vunpack.c.l.s4 1934713408
        %v1113 = vunpack.c.0.s8 %v1112
        %v1114 = vperm.slane %v1106, %v1113
        %v1115 = vrot.slane %v1102, 4
        %v1116 = vsel %vm545, %v1115, %v1096
        %v1117 = vrot.slane %v1096, 4
        %v1118 = vsel %vm545, %v1102, %v1117
        %v1120 = vunpack.c.l.s4 1934713408
        %v1121 = vunpack.c.0.s8 %v1120
        %v1122 = vperm.slane %v1116, %v1121
        %v1124 = vunpack.c.l.s4 1934713408
        %v1125 = vunpack.c.0.s8 %v1124
        %v1126 = vperm.slane %v1118, %v1125
        %v1127 = vrot.slane %v1122, 4
        %v1128 = vsel %vm545, %v1127, %v1110
        %v1129 = vrot.slane %v1110, 4
        %v1130 = vsel %vm545, %v1122, %v1129
        %v1131 = vrot.slane %v1126, 4
        %v1132 = vsel %vm545, %v1131, %v1114
        %v1133 = vrot.slane %v1114, 4
        %v1134 = vsel %vm545, %v1126, %v1133
        %vm1135 = vcmask 261120
        %v1137 = vsel %vm1135, %v648, 0
        %v1140 = vsel %vm1135, %v834, 0
        %v1143 = vsel %vm1135, %v888, 0
        %1145 = vmatpush.xpose.msra.mxu0 0.0
        %1146 = vmatpush.xpose.msra.mxu0 0.0
        %1147 = vmatpush.xpose.msra.mxu0 0.0
        %1148 = vmatpush.xpose.msra.mxu0 0.0
        %1149 = vmatpush.xpose.msra.mxu0 0.0
        %1150 = vmatpush.xpose.msra.mxu0 0.0
        %1151 = vmatpush.xpose.msra.mxu0 0.0
        %1152 = vmatpush.xpose.msra.mxu0 0.0
        %1153 = vmatpush.xpose.msra.mxu0 0.0
        %1154 = vmatpush.xpose.msra.mxu0 0.0
        %1155 = vmatpush.xpose.msra.mxu0 0.0
        %1156 = vmatpush.xpose.msra.mxu0 0.0
        %1157 = vmatpush.xpose.msra.mxu0 0.0
        %1158 = vmatpush.xpose.msra.mxu0 0.0
        %1159 = vmatpush.xpose.msra.mxu0 %v1143
        %1160 = vmatpush.xpose.msra.mxu0 %v1140
        %1161 = vmatmul.f32.gmra.mxu0 %v1137
        %v1162 = vpop.f32.mrf.mxu0
        %v1163 = vadd.f32 0.0, %v1162
        %1164 = vdwg.mxu0
        %v1166 = vsel %vm1135, %v650, 0
        %v1169 = vsel %vm1135, %v836, 0
        %v1172 = vsel %vm1135, %v890, 0
        %1174 = vmatpush.xpose.msra.mxu0 0.0
        %1175 = vmatpush.xpose.msra.mxu0 0.0
        %1176 = vmatpush.xpose.msra.mxu0 0.0
        %1177 = vmatpush.xpose.msra.mxu0 0.0
        %1178 = vmatpush.xpose.msra.mxu0 0.0
        %1179 = vmatpush.xpose.msra.mxu0 0.0
        %1180 = vmatpush.xpose.msra.mxu0 0.0
        %1181 = vmatpush.xpose.msra.mxu0 0.0
        %1182 = vmatpush.xpose.msra.mxu0 0.0
        %1183 = vmatpush.xpose.msra.mxu0 0.0
        %1184 = vmatpush.xpose.msra.mxu0 0.0
        %1185 = vmatpush.xpose.msra.mxu0 0.0
        %1186 = vmatpush.xpose.msra.mxu0 0.0
        %1187 = vmatpush.xpose.msra.mxu0 0.0
        %1188 = vmatpush.xpose.msra.mxu0 %v1172
        %1189 = vmatpush.xpose.msra.mxu0 %v1169
        %1190 = vmatmul.f32.gmra.mxu0 %v1166
        %v1191 = vpop.f32.mrf.mxu0
        %v1192 = vadd.f32 0.0, %v1191
        %1193 = vdwg.mxu0
        %v1195 = vsel %vm1135, %v652, 0
        %v1198 = vsel %vm1135, %v838, 0
        %v1201 = vsel %vm1135, %v892, 0
        %1203 = vmatpush.xpose.msra.mxu0 0.0
        %1204 = vmatpush.xpose.msra.mxu0 0.0
        %1205 = vmatpush.xpose.msra.mxu0 0.0
        %1206 = vmatpush.xpose.msra.mxu0 0.0
        %1207 = vmatpush.xpose.msra.mxu0 0.0
        %1208 = vmatpush.xpose.msra.mxu0 0.0
        %1209 = vmatpush.xpose.msra.mxu0 0.0
        %1210 = vmatpush.xpose.msra.mxu0 0.0
        %1211 = vmatpush.xpose.msra.mxu0 0.0
        %1212 = vmatpush.xpose.msra.mxu0 0.0
        %1213 = vmatpush.xpose.msra.mxu0 0.0
        %1214 = vmatpush.xpose.msra.mxu0 0.0
        %1215 = vmatpush.xpose.msra.mxu0 0.0
        %1216 = vmatpush.xpose.msra.mxu0 0.0
        %1217 = vmatpush.xpose.msra.mxu0 %v1201
        %1218 = vmatpush.xpose.msra.mxu0 %v1198
        %1219 = vmatmul.f32.gmra.mxu0 %v1195
        %v1220 = vpop.f32.mrf.mxu0
        %v1221 = vadd.f32 0.0, %v1220
        %1222 = vdwg.mxu0
        %v1224 = vsel %vm1135, %v654, 0
        %v1227 = vsel %vm1135, %v840, 0
        %v1230 = vsel %vm1135, %v894, 0
        %1232 = vmatpush.xpose.msra.mxu0 0.0
        %1233 = vmatpush.xpose.msra.mxu0 0.0
        %1234 = vmatpush.xpose.msra.mxu0 0.0
        %1235 = vmatpush.xpose.msra.mxu0 0.0
        %1236 = vmatpush.xpose.msra.mxu0 0.0
        %1237 = vmatpush.xpose.msra.mxu0 0.0
        %1238 = vmatpush.xpose.msra.mxu0 0.0
        %1239 = vmatpush.xpose.msra.mxu0 0.0
        %1240 = vmatpush.xpose.msra.mxu0 0.0
        %1241 = vmatpush.xpose.msra.mxu0 0.0
        %1242 = vmatpush.xpose.msra.mxu0 0.0
        %1243 = vmatpush.xpose.msra.mxu0 0.0
        %1244 = vmatpush.xpose.msra.mxu0 0.0
        %1245 = vmatpush.xpose.msra.mxu0 0.0
        %1246 = vmatpush.xpose.msra.mxu0 %v1230
        %1247 = vmatpush.xpose.msra.mxu0 %v1227
        %1248 = vmatmul.f32.gmra.mxu0 %v1224
        %v1249 = vpop.f32.mrf.mxu0
        %v1250 = vadd.f32 0.0, %v1249
        %1251 = vdwg.mxu0
        %vm1252 = vcmask 130048
        %v1253 = vsel %vm1252, %v1163, -inf
        %1254 = vmax.xlane.f32.xlu0 %v1253
        %v1255 = vpop.xlane.xlu0 %1254
        %v1256 = vsel %vm1252, %v1192, -inf
        %1257 = vmax.xlane.f32.xlu0 %v1256
        %v1258 = vpop.xlane.xlu0 %1257
        %v1259 = vsel %vm1252, %v1221, -inf
        %1260 = vmax.xlane.f32.xlu0 %v1259
        %v1261 = vpop.xlane.xlu0 %1260
        %v1262 = vsel %vm1252, %v1250, -inf
        %1263 = vmax.xlane.f32.xlu0 %v1262
        %v1264 = vpop.xlane.xlu0 %1263
        %v1265 = vsub.f32 %v1163, %v1255
        %v1266 = vsub.f32 %v1192, %v1258
        %v1267 = vsub.f32 %v1221, %v1261
        %v1268 = vsub.f32 %v1250, %v1264
        %v1269 = vmul.f32 %v1265, 1.442695
        %v1270 = vpow.pop %v1269
        %v1271 = vmul.f32 %v1266, 1.442695
        %v1272 = vpow.pop %v1271
        %v1273 = vmul.f32 %v1267, 1.442695
        %v1274 = vpow.pop %v1273
        %v1275 = vmul.f32 %v1268, 1.442695
        %v1276 = vpow.pop %v1275
        %v1277 = vsel %vm1252, %v1270, 0.0
        %1278 = vadd.xlane.f32.xlu0 %v1277
        %v1279 = vpop.xlane.xlu0 %1278
        %v1280 = vsel %vm1252, %v1272, 0.0
        %1281 = vadd.xlane.f32.xlu0 %v1280
        %v1282 = vpop.xlane.xlu0 %1281
        %v1283 = vsel %vm1252, %v1274, 0.0
        %1284 = vadd.xlane.f32.xlu0 %v1283
        %v1285 = vpop.xlane.xlu0 %1284
        %v1286 = vsel %vm1252, %v1276, 0.0
        %1287 = vadd.xlane.f32.xlu0 %v1286
        %v1288 = vpop.xlane.xlu0 %1287
        %v1290 = vsel %vm1252, %v1270, 0
        %1292 = vmatpush.msra.mxu0 0.0
        %1293 = vmatpush.msra.mxu0 0.0
        %1294 = vmatpush.msra.mxu0 0.0
        %1295 = vmatpush.msra.mxu0 0.0
        %1296 = vmatpush.msra.mxu0 0.0
        %1297 = vmatpush.msra.mxu0 0.0
        %1298 = vmatpush.msra.mxu0 0.0
        %1299 = vmatpush.msra.mxu0 0.0
        %1300 = vmatpush.msra.mxu0 0.0
        %1301 = vmatpush.msra.mxu0 0.0
        %1302 = vmatpush.msra.mxu0 0.0
        %1303 = vmatpush.msra.mxu0 0.0
        %1304 = vmatpush.msra.mxu0 0.0
        %1305 = vmatpush.msra.mxu0 0.0
        %1306 = vmatpush.msra.mxu0 %v1128
        %1307 = vmatpush.msra.mxu0 %v1074
        %1308 = vmatmul.f32.gmra.mxu0 %v1290
        %v1309 = vpop.f32.mrf.mxu0
        %v1310 = vadd.f32 0.0, %v1309
        %1311 = vdwg.mxu0
        %v1313 = vsel %vm1252, %v1272, 0
        %1315 = vmatpush.msra.mxu0 0.0
        %1316 = vmatpush.msra.mxu0 0.0
        %1317 = vmatpush.msra.mxu0 0.0
        %1318 = vmatpush.msra.mxu0 0.0
        %1319 = vmatpush.msra.mxu0 0.0
        %1320 = vmatpush.msra.mxu0 0.0
        %1321 = vmatpush.msra.mxu0 0.0
        %1322 = vmatpush.msra.mxu0 0.0
        %1323 = vmatpush.msra.mxu0 0.0
        %1324 = vmatpush.msra.mxu0 0.0
        %1325 = vmatpush.msra.mxu0 0.0
        %1326 = vmatpush.msra.mxu0 0.0
        %1327 = vmatpush.msra.mxu0 0.0
        %1328 = vmatpush.msra.mxu0 0.0
        %1329 = vmatpush.msra.mxu0 %v1130
        %1330 = vmatpush.msra.mxu0 %v1076
        %1331 = vmatmul.f32.gmra.mxu0 %v1313
        %v1332 = vpop.f32.mrf.mxu0
        %v1333 = vadd.f32 0.0, %v1332
        %1334 = vdwg.mxu0
        %v1336 = vsel %vm1252, %v1274, 0
        %1338 = vmatpush.msra.mxu0 0.0
        %1339 = vmatpush.msra.mxu0 0.0
        %1340 = vmatpush.msra.mxu0 0.0
        %1341 = vmatpush.msra.mxu0 0.0
        %1342 = vmatpush.msra.mxu0 0.0
        %1343 = vmatpush.msra.mxu0 0.0
        %1344 = vmatpush.msra.mxu0 0.0
        %1345 = vmatpush.msra.mxu0 0.0
        %1346 = vmatpush.msra.mxu0 0.0
        %1347 = vmatpush.msra.mxu0 0.0
        %1348 = vmatpush.msra.mxu0 0.0
        %1349 = vmatpush.msra.mxu0 0.0
        %1350 = vmatpush.msra.mxu0 0.0
        %1351 = vmatpush.msra.mxu0 0.0
        %1352 = vmatpush.msra.mxu0 %v1132
        %1353 = vmatpush.msra.mxu0 %v1078
        %1354 = vmatmul.f32.gmra.mxu0 %v1336
        %v1355 = vpop.f32.mrf.mxu0
        %v1356 = vadd.f32 0.0, %v1355
        %1357 = vdwg.mxu0
        %v1359 = vsel %vm1252, %v1276, 0
        %1361 = vmatpush.msra.mxu0 0.0
        %1362 = vmatpush.msra.mxu0 0.0
        %1363 = vmatpush.msra.mxu0 0.0
        %1364 = vmatpush.msra.mxu0 0.0
        %1365 = vmatpush.msra.mxu0 0.0
        %1366 = vmatpush.msra.mxu0 0.0
        %1367 = vmatpush.msra.mxu0 0.0
        %1368 = vmatpush.msra.mxu0 0.0
        %1369 = vmatpush.msra.mxu0 0.0
        %1370 = vmatpush.msra.mxu0 0.0
        %1371 = vmatpush.msra.mxu0 0.0
        %1372 = vmatpush.msra.mxu0 0.0
        %1373 = vmatpush.msra.mxu0 0.0
        %1374 = vmatpush.msra.mxu0 0.0
        %1375 = vmatpush.msra.mxu0 %v1134
        %1376 = vmatpush.msra.mxu0 %v1080
        %1377 = vmatmul.f32.gmra.mxu0 %v1359
        %v1378 = vpop.f32.mrf.mxu0
        %v1379 = vadd.f32 0.0, %v1378
        %1380 = vdwg.mxu0
        %v1381 = vrcp.pop %v1279
        %v1382 = vrcp.pop %v1282
        %v1383 = vrcp.pop %v1285
        %v1384 = vrcp.pop %v1288
        %v1385 = vmul.f32 %v1310, %v1381
        %v1386 = vmul.f32 %v1333, %v1382
        %v1387 = vmul.f32 %v1356, %v1383
        %v1388 = vmul.f32 %v1379, %v1384
        %v1389 = vrot.slane %v1387, 4
        %v1390 = vsel %vm545, %v1389, %v1385
        %v1391 = vrot.slane %v1385, 4
        %v1392 = vsel %vm545, %v1387, %v1391
        %v1394 = vunpack.c.l.s4 1983009808
        %v1395 = vunpack.c.0.s8 %v1394
        %v1396 = vperm.slane %v1390, %v1395
        %v1398 = vunpack.c.l.s4 1983009808
        %v1399 = vunpack.c.0.s8 %v1398
        %v1400 = vperm.slane %v1392, %v1399
        %v1401 = vrot.slane %v1388, 4
        %v1402 = vsel %vm545, %v1401, %v1386
        %v1403 = vrot.slane %v1386, 4
        %v1404 = vsel %vm545, %v1388, %v1403
        %v1406 = vunpack.c.l.s4 1983009808
        %v1407 = vunpack.c.0.s8 %v1406
        %v1408 = vperm.slane %v1402, %v1407
        %v1410 = vunpack.c.l.s4 1983009808
        %v1411 = vunpack.c.0.s8 %v1410
        %v1412 = vperm.slane %v1404, %v1411
        %v1413 = vrot.slane %v1408, 4
        %v1414 = vsel %vm545, %v1413, %v1396
        %v1415 = vrot.slane %v1396, 4
        %v1416 = vsel %vm545, %v1408, %v1415
        %v1418 = vunpack.c.l.s4 1934713408
        %v1419 = vunpack.c.0.s8 %v1418
        %v1420 = vperm.slane %v1414, %v1419
        %v1422 = vunpack.c.l.s4 1934713408
        %v1423 = vunpack.c.0.s8 %v1422
        %v1424 = vperm.slane %v1416, %v1423
        %v1425 = vrot.slane %v1412, 4
        %v1426 = vsel %vm545, %v1425, %v1400
        %v1427 = vrot.slane %v1400, 4
        %v1428 = vsel %vm545, %v1412, %v1427
        %v1430 = vunpack.c.l.s4 1934713408
        %v1431 = vunpack.c.0.s8 %v1430
        %v1432 = vperm.slane %v1426, %v1431
        %v1434 = vunpack.c.l.s4 1934713408
        %v1435 = vunpack.c.0.s8 %v1434
        %v1436 = vperm.slane %v1428, %v1435
        %v1437 = vrot.slane %v1420, 4
        %v1438 = vsel %vm545, 0.0, %v1437
        %v1439 = vrot.slane %v1424, 4
        %v1440 = vsel %vm545, 0.0, %v1439
        %v1441 = vrot.slane %v1432, 4
        %v1442 = vsel %vm545, 0.0, %v1441
        %v1443 = vrot.slane %v1436, 4
        %v1444 = vsel %vm545, 0.0, %v1443
        %v1445 = vsel %vm545, %v1439, %v1420
        %v1447 = vunpack.c.l.s4 1983009808
        %v1448 = vunpack.c.0.s8 %v1447
        %v1449 = vperm.slane %v1445, %v1448
        %v1450 = vrot.slane %v1440, 4
        %v1451 = vsel %vm545, %v1450, %v1438
        %v1453 = vunpack.c.l.s4 1983009808
        %v1454 = vunpack.c.0.s8 %v1453
        %v1455 = vperm.slane %v1451, %v1454
        %v1456 = vsel %vm545, %v1443, %v1432
        %v1458 = vunpack.c.l.s4 1983009808
        %v1459 = vunpack.c.0.s8 %v1458
        %v1460 = vperm.slane %v1456, %v1459
        %v1461 = vrot.slane %v1444, 4
        %v1462 = vsel %vm545, %v1461, %v1442
        %v1464 = vunpack.c.l.s4 1983009808
        %v1465 = vunpack.c.0.s8 %v1464
        %v1466 = vperm.slane %v1462, %v1465
        %v1467 = vrot.slane %v1455, 4
        %v1468 = vsel %vm545, %v1467, %v1449
        %v1469 = vrot.slane %v1449, 4
        %v1470 = vsel %vm545, %v1455, %v1469
        %v1472 = vunpack.c.l.s4 1934713408
        %v1473 = vunpack.c.0.s8 %v1472
        %v1474 = vperm.slane %v1468, %v1473
        %v1476 = vunpack.c.l.s4 1934713408
        %v1477 = vunpack.c.0.s8 %v1476
        %v1478 = vperm.slane %v1470, %v1477
        %v1479 = vrot.slane %v1466, 4
        %v1480 = vsel %vm545, %v1479, %v1460
        %v1481 = vrot.slane %v1460, 4
        %v1482 = vsel %vm545, %v1466, %v1481
        %v1484 = vunpack.c.l.s4 1934713408
        %v1485 = vunpack.c.0.s8 %v1484
        %v1486 = vperm.slane %v1480, %v1485
        %v1488 = vunpack.c.l.s4 1934713408
        %v1489 = vunpack.c.0.s8 %v1488
        %v1490 = vperm.slane %v1482, %v1489
        %v1491 = vrot.slane %v1486, 4
        %v1492 = vsel %vm545, %v1491, %v1474
        %v1493 = vrot.slane %v1474, 4
        %v1494 = vsel %vm545, %v1486, %v1493
        %v1495 = vrot.slane %v1490, 4
        %v1496 = vsel %vm545, %v1495, %v1478
        %v1497 = vrot.slane %v1478, 4
        %v1498 = vsel %vm545, %v1490, %v1497
        %1500 = vrot.lane.b32.xlu0 %v1494, 32
        %v1501 = vpop.permute.xlu0 %1500
        %1504 = vrot.lane.b32.xlu0 %v1496, 64
        %v1505 = vpop.permute.xlu0 %1504
        %1508 = vrot.lane.b32.xlu0 %v1498, 96
        %v1509 = vpop.permute.xlu0 %1508
        %v1511 = vsel %vm1135, %v1492, %v1501
        %vm1512 = vcmask 523264
        %v1513 = vsel %vm1512, %v1511, %v1505
        %vm1514 = vcmask 785408
        %v1515 = vsel %vm1514, %v1513, %v1509
        %v1516 = vld [vmem:[#allocation11] sm:$0xff]
        %v1517 = vld [vmem:[#allocation11 + $0x8] sm:$0xff]
        %v1518 = vld [vmem:[#allocation11 + $0x10] sm:$0xff]
        %v1519 = vld [vmem:[#allocation11 + $0x18] sm:$0xff]
        %v1520 = vld [vmem:[#allocation11 + $0x20] sm:$0xff]
        %v1521 = vld [vmem:[#allocation11 + $0x28] sm:$0xff]
        %v1522 = vld [vmem:[#allocation11 + $0x30] sm:$0xff]
        %v1523 = vld [vmem:[#allocation11 + $0x38] sm:$0xff]
        %v1524 = vld [vmem:[#allocation11 + $0x40] sm:$0xff]
        %v1525 = vld [vmem:[#allocation11 + $0x48] sm:$0xff]
        %v1526 = vld [vmem:[#allocation11 + $0x50] sm:$0xff]
        %v1527 = vld [vmem:[#allocation11 + $0x58] sm:$0xff]
        %v1528 = vld [vmem:[#allocation11 + $0x60] sm:$0xff]
        %v1529 = vld [vmem:[#allocation11 + $0x68] sm:$0xff]
        %v1530 = vld [vmem:[#allocation11 + $0x70] sm:$0xff]
        %v1531 = vld [vmem:[#allocation11 + $0x78] sm:$0xff]
        %1532 = vmatpush.msra.mxu0 %v1531
        %1533 = vmatpush.msra.mxu0 %v1530
        %1534 = vmatpush.msra.mxu0 %v1529
        %1535 = vmatpush.msra.mxu0 %v1528
        %1536 = vmatpush.msra.mxu0 %v1527
        %1537 = vmatpush.msra.mxu0 %v1526
        %1538 = vmatpush.msra.mxu0 %v1525
        %1539 = vmatpush.msra.mxu0 %v1524
        %1540 = vmatpush.msra.mxu0 %v1523
        %1541 = vmatpush.msra.mxu0 %v1522
        %1542 = vmatpush.msra.mxu0 %v1521
        %1543 = vmatpush.msra.mxu0 %v1520
        %1544 = vmatpush.msra.mxu0 %v1519
        %1545 = vmatpush.msra.mxu0 %v1518
        %1546 = vmatpush.msra.mxu0 %v1517
        %1547 = vmatpush.msra.mxu0 %v1516
        %1548 = vmatmul.f32.gmra.mxu0 %v1515
        %v1549 = vpop.f32.mrf.mxu0
        %v1550 = vadd.f32 0.0, %v1549
        %1551 = vdwg.mxu0
        %v1552 = vadd.f32 %v465, %v1550
        %1553 = vst [vmem:[%s376] sm:$0xff] %v1552
        %s1554 = sand.u32 %s187, 1
        %s1555 = scalar_lea.sflag [#allocation5], %s1554
        %s1556 = sand.u32 %s187, 1
        %s1557 = smul.addr %s1556, 8
        %s1558 = scalar_lea.vmem [#allocation12], %s1557
        // Predicated region
        $region69: #{tpu_custom_call.1} parent=43 // pred_check
          %p1559 = pneg %p197
        $region70: #{tpu_custom_call.1} parent=43 // pred_check_branch
          %1561 = sbr.rel (%p1559) target = $region72
        $region71: #{tpu_custom_call.1} parent=43 // pred_region
          %1563 = vsyncadd %s1555, 0
          %s1564 = sadd.s32 %s32, %s31
          %s1565 = smul.addr %s1564, 8
          %s1566 = scalar_lea.hbm %s6, %s1565
          %s1568 = sshll.u32 %s1558, 4
          %s1569 = int_to_ptr.vmem [resolvable:$true] %s1568
          %s1570 = sshll.u32 %s1566, 4
          %s1571 = int_to_ptr.hbm [resolvable:$true] %s1570
          %1573 = dma.vmem_to_hbm [thread:$0]  %s1569, 128, %s1571, %s1555
        $region72: #{tpu_custom_call.1} parent=43 // pred_fallthru
          _
      $region44: #{tpu_custom_call.1} parent=5 // pred_fallthru
        _
      %p1574 = scmp.le.s32.totalorder 2, %s22
      // Predicated region
      $region73: #{tpu_custom_call.1} parent=5 // pred_check
        %p1575 = pneg %p1574
      $region74: #{tpu_custom_call.1} parent=5 // pred_check_branch
        %1577 = sbr.rel (%p1575) target = $region76
      $region75: #{tpu_custom_call.1} parent=5 // pred_region
        %s1578 = ssub.s32 %s22, 2
        // Predicated region
        $region77: #{tpu_custom_call.1} parent=75 // pred_check
          %p1579 = pneg %p203
        $region78: #{tpu_custom_call.1} parent=75 // pred_check_branch
          %1581 = sbr.rel (%p1579) target = $region80
        $region79: #{tpu_custom_call.1} parent=75 // pred_region
          %s1582 = sand.u32 %s188, 1
          %s1583 = scalar_lea.sflag [#allocation5], %s1582
          %s1584 = sand.u32 %s188, 1
          %s1585 = smul.addr %s1584, 8
          %s1586 = scalar_lea.vmem [#allocation12], %s1585
          %1588 = dma.done %s1583, 128
        $region80: #{tpu_custom_call.1} parent=75 // pred_fallthru
          _
      $region76: #{tpu_custom_call.1} parent=5 // pred_fallthru
        _
    $region6: #{tpu_custom_call.1} parent=1 // loop_footer
      %s26 = sadd.s32 1, %s22
    $region7: #{tpu_custom_call.1} parent=1 // loop_footer_branch
      %21 = sbr.rel target = $region3
    $region8: #{tpu_custom_call.1} parent=1 // loop_exit
      _
    %1589 = vsyncpa [#allocation4], 1
    %s1590 = scalar_lea.sflag [#allocation4], 1
    %1591 = vsyncpa %s1590, 1
    %1592 = vsyncpa [#allocation7], 1
    %s1593 = scalar_lea.sflag [#allocation7], 1
    %1594 = vsyncpa %s1593, 1
    %1595 = vsyncpa [#allocation10], 1
    %1596 = vsyncpa [#allocation5], 1
    %s1597 = scalar_lea.sflag [#allocation5], 1
    %1598 = vsyncpa %s1597, 1

</llo_original>
